<compile_context>
chip_gen: v5e
topology: v5e:2x2
jax: 0.10.0
libtpu: 0.0.40
codegen_flags: <defaults>
</compile_context>

<pallas_src>
import math
import functools

import jax
import jax.numpy as jnp
from jax.experimental import pallas as pl
from jax.experimental.pallas import tpu as pltpu


# ----------------------------------------------------------------------------
# Fully fused MHA kernel: one batch element per grid step.
# ----------------------------------------------------------------------------
def _mha_fused_kernel(decay_ref, dif_ref, q_ref, k_ref, v_ref,
                      kw_ref, kb_ref, vw_ref, vb_ref, ow_ref, ob_ref,
                      *rest, n_heads, d_k, zero_pad, causal):
    if causal:
        o_ref, acc_ref = rest
        mask_ref = None
    else:
        mask_ref, o_ref, acc_ref = rest

    seq = q_ref.shape[1]
    d_model = n_heads * d_k
    f32 = jnp.float32
    bf16 = jnp.bfloat16

    # ---- fused input projections (bf16 MXU operands, f32 accumulate) -------
    kw = kw_ref[...].astype(bf16)          # (D, D)
    vw = vw_ref[...].astype(bf16)          # (D, D)
    kb = kb_ref[...]                       # (1, D) f32

    # Two back-to-back dots against the same kw: RHS stays resident in the MXU
    # weight registers, no (2S, D) concat staging copy in VMEM.
    qp = jnp.dot(q_ref[0].astype(bf16), kw, preferred_element_type=f32) + kb
    kp = jnp.dot(k_ref[0].astype(bf16), kw, preferred_element_type=f32) + kb
    vp = jnp.dot(v_ref[0].astype(bf16), vw, preferred_element_type=f32) + vb_ref[...]

    # ---- score-side masks / weights ----------------------------------------
    if causal:
        rows = jax.lax.broadcasted_iota(jnp.int32, (seq, seq), 0)
        cols = jax.lax.broadcasted_iota(jnp.int32, (seq, seq), 1)
        neg_mask = cols > rows                      # True where masked out
    else:
        neg_mask = mask_ref[...] == 0

    dif = dif_ref[0].astype(f32)                    # streamed bf16, upcast once

    # ---- per-head attention: write each head into the VMEM scratch ---------
    for h in range(n_heads):
        lo = h * d_k
        qh = qp[:, lo:lo + d_k].astype(bf16)        # (S, d_k)
        kh = kp[:, lo:lo + d_k].astype(bf16)
        vh = vp[:, lo:lo + d_k].astype(bf16)

        # 1/sqrt(d_k) is already folded into decay (wrapper).
        s = jnp.dot(qh, kh.T, preferred_element_type=f32)       # (S, S) f32
        s = s * dif * decay_ref[h].astype(f32)
        s = jnp.where(neg_mask, jnp.float32(-1e32), s)

        m = jnp.max(s, axis=-1, keepdims=True)
        e = jnp.exp(s - m)
        p = e * pl.reciprocal(jnp.sum(e, axis=-1, keepdims=True), approx=True)

        acc_ref[:, lo:lo + d_k] = jnp.dot(p.astype(bf16), vh,
                                          preferred_element_type=f32)

    if zero_pad:
        # torch.cat([pad_zero, scores[:, :, 1:, :]]): query row 0 -> zeros.
        # Equivalent to zeroing row 0 of the concatenated head outputs.
        acc_ref[pl.ds(0, 1), :] = jnp.zeros((1, d_model), f32)

    # ---- fused output projection -------------------------------------------
    out = jnp.dot(acc_ref[...].astype(bf16), ow_ref[...].astype(bf16),
                  preferred_element_type=f32) + ob_ref[...]      # (S, D)
    o_ref[0] = out.astype(o_ref.dtype)


# ----------------------------------------------------------------------------
# pallas_call builder
# ----------------------------------------------------------------------------
def _mha_call(kernel, decay, dif_bf16, q, k, v, params, mask, *,
              seq, d_model, n_heads, causal, single_buffer_constants):
    bs = q.shape[0]
    if single_buffer_constants:
        const_kw = dict(pipeline_mode=pl.Buffered(1))
    else:
        const_kw = {}

    in_specs = [
        pl.BlockSpec((n_heads, seq, seq), lambda bi: (0, 0, 0), **const_kw),  # decay
        pl.BlockSpec((1, seq, seq), lambda bi: (bi, 0, 0)),                   # dif
        pl.BlockSpec((1, seq, d_model), lambda bi: (bi, 0, 0)),               # q
        pl.BlockSpec((1, seq, d_model), lambda bi: (bi, 0, 0)),               # k
        pl.BlockSpec((1, seq, d_model), lambda bi: (bi, 0, 0)),               # v
        pl.BlockSpec((d_model, d_model), lambda bi: (0, 0), **const_kw),      # k_w
        pl.BlockSpec((1, d_model), lambda bi: (0, 0), **const_kw),            # k_b
        pl.BlockSpec((d_model, d_model), lambda bi: (0, 0), **const_kw),      # v_w
        pl.BlockSpec((1, d_model), lambda bi: (0, 0), **const_kw),            # v_b
        pl.BlockSpec((d_model, d_model), lambda bi: (0, 0), **const_kw),      # o_w
        pl.BlockSpec((1, d_model), lambda bi: (0, 0), **const_kw),            # o_b
    ]
    inputs = [decay, dif_bf16, q, k, v,
              params["k_w"], params["k_b"].reshape(1, d_model),
              params["v_w"], params["v_b"].reshape(1, d_model),
              params["o_w"], params["o_b"].reshape(1, d_model)]
    if not causal:
        in_specs.append(pl.BlockSpec((seq, seq), lambda bi: (0, 0), **const_kw))
        inputs.append(mask.astype(jnp.int32))

    # VMEM footprint (bytes) -> scoped limit with 2x headroom, capped for v7x.
    vmem_bytes = (
        n_heads * seq * seq * 2                      # decay  (bf16, single-buf)
        + 2 * seq * seq * 2                          # dif    (bf16, double-buf)
        + 2 * 3 * seq * d_model * 4                  # q/k/v  (f32,  double-buf)
        + 3 * d_model * d_model * 4 + 3 * d_model * 4  # weights + biases
        + 2 * seq * d_model * 4                      # output (double-buf)
        + seq * d_model * 4                          # head-output scratch
        + (0 if causal else seq * seq * 4)           # explicit mask
    )
    vmem_limit = int(min(64 * 1024 * 1024, max(16 * 1024 * 1024, 2 * vmem_bytes)))

    return pl.pallas_call(
        kernel,
        out_shape=jax.ShapeDtypeStruct((bs, seq, d_model), jnp.float32),
        grid=(bs,),
        in_specs=in_specs,
        out_specs=pl.BlockSpec((1, seq, d_model), lambda bi: (bi, 0, 0)),
        scratch_shapes=[pltpu.VMEM((seq, d_model), jnp.float32)],
        compiler_params=pltpu.CompilerParams(
            dimension_semantics=("parallel",),       # megacore sharding on v7x
            vmem_limit_bytes=vmem_limit),
    )(*inputs)


# ----------------------------------------------------------------------------
# Wrapper (mirrors MultiHeadAttention.forward)
# ----------------------------------------------------------------------------
def multi_head_attention_forward(params, q, k, v, dif_mask, mask,
                                 *, n_heads, d_k, zero_pad, b_const=1.0):
    """q/k/v: (bs, S, d_model); dif_mask: (bs, S, S); mask: (S, S) or None
    (None -> causal mask generated in-kernel).  Returns (bs, S, d_model)."""
    bs, seq, d_model = q.shape
    assert d_model == n_heads * d_k

    # Head-dependent memory decay, hoisted out of the kernel, with the
    # 1/sqrt(d_k) softmax scale folded in; streamed as bf16.
    a = jax.nn.sigmoid(params["a"]).reshape(n_heads, 1, 1)
    alpha = jax.nn.softplus(params["alpha"]).reshape(n_heads, 1, 1)
    idx = jnp.arange(seq, dtype=jnp.float32)
    pos = jnp.abs(idx[None, :] - idx[:, None])                       # (S, S)
    decay = a + (1.0 - a) * b_const * jnp.exp(-alpha * pos[None])    # (h,S,S)
    decay = (decay * jnp.float32(1.0 / math.sqrt(d_k))).astype(jnp.bfloat16)

    dif_bf16 = dif_mask.astype(jnp.bfloat16)

    causal = mask is None
    kernel = functools.partial(_mha_fused_kernel, n_heads=n_heads, d_k=d_k,
                               zero_pad=zero_pad, causal=causal)
    call = functools.partial(_mha_call, kernel, decay, dif_bf16, q, k, v,
                             params, mask, seq=seq, d_model=d_model,
                             n_heads=n_heads, causal=causal)
    try:
        return call(single_buffer_constants=True)
    except Exception:
        # TODO(synk): capability-gate for jax versions without BlockSpec
        # pipeline_mode / pl.Buffered support; falls back to default buffering.
        return call(single_buffer_constants=False)


# ----------------------------------------------------------------------------
# Parameter init (xavier-uniform-like weights, zero biases)
# ----------------------------------------------------------------------------
def _xavier_uniform(key, shape):
    fan_in, fan_out = shape[0], shape[1]
    limit = math.sqrt(6.0 / (fan_in + fan_out))
    return jax.random.uniform(key, shape, jnp.float32, -limit, limit)


def init_mha_params(key, d_model, n_heads):
    ks = jax.random.split(key, 5)
    limit_a = math.sqrt(6.0 / (1 + n_heads))   # xavier on (n_heads, 1, 1)
    return {
        # stored as (d_in, d_out) so that y = x @ W + b
        "k_w": _xavier_uniform(ks[0], (d_model, d_model)),
        "k_b": jnp.zeros((d_model,), jnp.float32),
        "v_w": _xavier_uniform(ks[1], (d_model, d_model)),
        "v_b": jnp.zeros((d_model,), jnp.float32),
        "o_w": _xavier_uniform(ks[2], (d_model, d_model)),
        "o_b": jnp.zeros((d_model,), jnp.float32),
        "a": jax.random.uniform(ks[3], (n_heads,), jnp.float32, -limit_a, limit_a),
        "alpha": jax.random.uniform(ks[4], (n_heads,), jnp.float32,
                                    -limit_a, limit_a),
    }


# ----------------------------------------------------------------------------
# Pure-JAX reference (f32) of the PyTorch forward, for correctness check.
# ----------------------------------------------------------------------------
def mha_reference(params, q, k, v, dif_mask, mask,
                  *, n_heads, d_k, zero_pad, b_const=1.0):
    bs, seq, d_model = q.shape
    kp = k @ params["k_w"] + params["k_b"]
    qp = q @ params["k_w"] + params["k_b"]
    vp = v @ params["v_w"] + params["v_b"]

    def split(x):
        return x.reshape(bs, seq, n_heads, d_k).transpose(0, 2, 1, 3)

    qh, kh, vh = split(qp), split(kp), split(vp)
    scores = jnp.einsum("bhqd,bhkd->bhqk", qh, kh) / math.sqrt(d_k)

    idx = jnp.arange(seq, dtype=jnp.float32)
    pos = jnp.abs(idx[None, :] - idx[:, None])
    a = jax.nn.sigmoid(params["a"]).reshape(1, n_heads, 1, 1)
    alpha = jax.nn.softplus(params["alpha"]).reshape(1, n_heads, 1, 1)
    decay = a + (1.0 - a) * b_const * jnp.exp(-alpha * pos[None, None])

    scores = scores * dif_mask[:, None] * decay
    scores = jnp.where(mask[None, None] == 0, jnp.float32(-1e32), scores)
    p = jax.nn.softmax(scores, axis=-1)
    if zero_pad:
        p = p.at[:, :, 0, :].set(0.0)
    out = jnp.einsum("bhqk,bhkd->bhqd", p, vh)
    concat = out.transpose(0, 2, 1, 3).reshape(bs, seq, d_model)
    return concat @ params["o_w"] + params["o_b"]


# ----------------------------------------------------------------------------
if __name__ == "__main__":
    bs, seq = 2, 8
    n_heads, d_k = 4, 8
    d_model = n_heads * d_k          # 32

    root = jax.random.PRNGKey(0)
    k_param, k_q, k_k, k_v, k_dif = jax.random.split(root, 5)

    params = init_mha_params(k_param, d_model, n_heads)

    q = jax.random.normal(k_q, (bs, seq, d_model), jnp.float32)
    k = jax.random.normal(k_k, (bs, seq, d_model), jnp.float32)
    v = jax.random.normal(k_v, (bs, seq, d_model), jnp.float32)

    # "exercise weight" mask in (0, 1], per batch element
    dif_mask = jax.random.uniform(k_dif, (bs, seq, seq), jnp.float32,
                                  minval=0.1, maxval=1.0)
    # causal mask (same as the (1,1,S,S) torch mask)
    mask = jnp.tril(jnp.ones((seq, seq), jnp.int32))

    # fast path: causal mask generated in-kernel (no S^2 mask DMA)
    out = multi_head_attention_forward(
        params, q, k, v, dif_mask, None,
        n_heads=n_heads, d_k=d_k, zero_pad=True,
    )
    out = jax.block_until_ready(out)

    # general path: explicit mask array (module-faithful signature)
    out_masked = multi_head_attention_forward(
        params, q, k, v, dif_mask, mask,
        n_heads=n_heads, d_k=d_k, zero_pad=True,
    )
    out_masked = jax.block_until_ready(out_masked)

    ref = mha_reference(params, q, k, v, dif_mask, mask,
                        n_heads=n_heads, d_k=d_k, zero_pad=True)

    assert out.shape == (bs, seq, d_model)
    assert bool(jnp.all(jnp.isfinite(out)))
    assert bool(jnp.allclose(out, out_masked, rtol=1e-4, atol=1e-4))
    # bf16 MXU operands + bf16 dif/decay vs f32 reference -> loose tolerance
    assert bool(jnp.allclose(out, ref, rtol=5e-2, atol=5e-2))
    print("KERNEL_OK")
</pallas_src>

<mosaic_0001>
module attributes {stable_mosaic.version = 11 : i64} {
  func.func @_mha_fused_kernel(%arg0: i32, %arg1: memref<4x8x8xbf16, #tpu.memory_space<vmem>>, %arg2: memref<1x8x8xbf16, #tpu.memory_space<vmem>>, %arg3: memref<1x8x32xf32, #tpu.memory_space<vmem>>, %arg4: memref<1x8x32xf32, #tpu.memory_space<vmem>>, %arg5: memref<1x8x32xf32, #tpu.memory_space<vmem>>, %arg6: memref<32x32xf32, #tpu.memory_space<vmem>>, %arg7: memref<1x32xf32, #tpu.memory_space<vmem>>, %arg8: memref<32x32xf32, #tpu.memory_space<vmem>>, %arg9: memref<1x32xf32, #tpu.memory_space<vmem>>, %arg10: memref<32x32xf32, #tpu.memory_space<vmem>>, %arg11: memref<1x32xf32, #tpu.memory_space<vmem>>, %arg12: memref<1x8x32xf32, #tpu.memory_space<vmem>>, %arg13: memref<8x32xf32, #tpu.memory_space<vmem>>) attributes {dimension_semantics = [#tpu.dimension_semantics<parallel>], iteration_bounds = array<i64: 2>, scalar_prefetch = 0 : i64, scratch_operands = 1 : i64, tpu.core_type = #tpu.core_type<tc>, window_params = [{pipeline_mode = #tpu.pipeline_mode<synchronous>, transform_indices = @transform_0, window_bounds = array<i64: 4, 8, 8>}, {transform_indices = @transform_1, window_bounds = array<i64: 1, 8, 8>}, {transform_indices = @transform_2, window_bounds = array<i64: 1, 8, 32>}, {transform_indices = @transform_3, window_bounds = array<i64: 1, 8, 32>}, {transform_indices = @transform_4, window_bounds = array<i64: 1, 8, 32>}, {pipeline_mode = #tpu.pipeline_mode<synchronous>, transform_indices = @transform_5, window_bounds = array<i64: 32, 32>}, {pipeline_mode = #tpu.pipeline_mode<synchronous>, transform_indices = @transform_6, window_bounds = array<i64: 1, 32>}, {pipeline_mode = #tpu.pipeline_mode<synchronous>, transform_indices = @transform_7, window_bounds = array<i64: 32, 32>}, {pipeline_mode = #tpu.pipeline_mode<synchronous>, transform_indices = @transform_8, window_bounds = array<i64: 1, 32>}, {pipeline_mode = #tpu.pipeline_mode<synchronous>, transform_indices = @transform_9, window_bounds = array<i64: 32, 32>}, {pipeline_mode = #tpu.pipeline_mode<synchronous>, transform_indices = @transform_10, window_bounds = array<i64: 1, 32>}, {transform_indices = @transform_11, window_bounds = array<i64: 1, 8, 32>}]} {
    %c0 = arith.constant 0 : index
    %c0_0 = arith.constant 0 : index
    %0 = vector.load %arg6[%c0, %c0_0] : memref<32x32xf32, #tpu.memory_space<vmem>>, vector<32x32xf32>
    %1 = arith.truncf %0 : vector<32x32xf32> to vector<32x32xbf16>
    %c0_1 = arith.constant 0 : index
    %c0_2 = arith.constant 0 : index
    %2 = vector.load %arg8[%c0_1, %c0_2] : memref<32x32xf32, #tpu.memory_space<vmem>>, vector<32x32xf32>
    %3 = arith.truncf %2 : vector<32x32xf32> to vector<32x32xbf16>
    %c0_3 = arith.constant 0 : index
    %c0_4 = arith.constant 0 : index
    %4 = vector.load %arg7[%c0_3, %c0_4] : memref<1x32xf32, #tpu.memory_space<vmem>>, vector<1x32xf32>
    %c0_5 = arith.constant 0 : index
    %c0_6 = arith.constant 0 : index
    %c0_7 = arith.constant 0 : index
    %5 = vector.load %arg3[%c0_5, %c0_6, %c0_7] : memref<1x8x32xf32, #tpu.memory_space<vmem>>, vector<1x8x32xf32>
    %6 = vector.shape_cast %5 : vector<1x8x32xf32> to vector<8x32xf32>
    %7 = arith.truncf %6 : vector<8x32xf32> to vector<8x32xbf16>
    %cst = arith.constant dense<0.000000e+00> : vector<8x32xf32>
    %8 = tpu.matmul %7, %1, %cst {dimension_numbers = #tpu.dot_dimension_numbers<[1], [0], [0], [1], [0, 0, 1, 1], [], []>} : vector<8x32xbf16>, vector<32x32xbf16>, vector<8x32xf32> -> vector<8x32xf32>
    %9 = vector.broadcast %4 : vector<1x32xf32> to vector<8x32xf32>
    %10 = arith.addf %8, %9 : vector<8x32xf32>
    %c0_8 = arith.constant 0 : index
    %c0_9 = arith.constant 0 : index
    %c0_10 = arith.constant 0 : index
    %11 = vector.load %arg4[%c0_8, %c0_9, %c0_10] : memref<1x8x32xf32, #tpu.memory_space<vmem>>, vector<1x8x32xf32>
    %12 = vector.shape_cast %11 : vector<1x8x32xf32> to vector<8x32xf32>
    %13 = arith.truncf %12 : vector<8x32xf32> to vector<8x32xbf16>
    %cst_11 = arith.constant dense<0.000000e+00> : vector<8x32xf32>
    %14 = tpu.matmul %13, %1, %cst_11 {dimension_numbers = #tpu.dot_dimension_numbers<[1], [0], [0], [1], [0, 0, 1, 1], [], []>} : vector<8x32xbf16>, vector<32x32xbf16>, vector<8x32xf32> -> vector<8x32xf32>
    %15 = vector.broadcast %4 : vector<1x32xf32> to vector<8x32xf32>
    %16 = arith.addf %14, %15 : vector<8x32xf32>
    %c0_12 = arith.constant 0 : index
    %c0_13 = arith.constant 0 : index
    %c0_14 = arith.constant 0 : index
    %17 = vector.load %arg5[%c0_12, %c0_13, %c0_14] : memref<1x8x32xf32, #tpu.memory_space<vmem>>, vector<1x8x32xf32>
    %18 = vector.shape_cast %17 : vector<1x8x32xf32> to vector<8x32xf32>
    %19 = arith.truncf %18 : vector<8x32xf32> to vector<8x32xbf16>
    %cst_15 = arith.constant dense<0.000000e+00> : vector<8x32xf32>
    %20 = tpu.matmul %19, %3, %cst_15 {dimension_numbers = #tpu.dot_dimension_numbers<[1], [0], [0], [1], [0, 0, 1, 1], [], []>} : vector<8x32xbf16>, vector<32x32xbf16>, vector<8x32xf32> -> vector<8x32xf32>
    %c0_16 = arith.constant 0 : index
    %c0_17 = arith.constant 0 : index
    %21 = vector.load %arg9[%c0_16, %c0_17] : memref<1x32xf32, #tpu.memory_space<vmem>>, vector<1x32xf32>
    %22 = vector.broadcast %21 : vector<1x32xf32> to vector<8x32xf32>
    %23 = arith.addf %20, %22 : vector<8x32xf32>
    %24 = tpu.iota {dimensions = array<i32: 0>} : vector<8x8xi32>
    %25 = tpu.iota {dimensions = array<i32: 1>} : vector<8x8xi32>
    %26 = arith.cmpi sgt, %25, %24 : vector<8x8xi32>
    %c0_18 = arith.constant 0 : index
    %c0_19 = arith.constant 0 : index
    %c0_20 = arith.constant 0 : index
    %27 = vector.load %arg2[%c0_18, %c0_19, %c0_20] : memref<1x8x8xbf16, #tpu.memory_space<vmem>>, vector<1x8x8xbf16>
    %28 = vector.shape_cast %27 : vector<1x8x8xbf16> to vector<8x8xbf16>
    %29 = arith.extf %28 : vector<8x8xbf16> to vector<8x8xf32>
    %30 = vector.extract_strided_slice %10 {offsets = [0, 0], sizes = [8, 8], strides = [1, 1]} : vector<8x32xf32> to vector<8x8xf32>
    %31 = arith.truncf %30 : vector<8x8xf32> to vector<8x8xbf16>
    %32 = vector.extract_strided_slice %16 {offsets = [0, 0], sizes = [8, 8], strides = [1, 1]} : vector<8x32xf32> to vector<8x8xf32>
    %33 = arith.truncf %32 : vector<8x8xf32> to vector<8x8xbf16>
    %34 = vector.extract_strided_slice %23 {offsets = [0, 0], sizes = [8, 8], strides = [1, 1]} : vector<8x32xf32> to vector<8x8xf32>
    %35 = arith.truncf %34 : vector<8x8xf32> to vector<8x8xbf16>
    %36 = tpu.transpose %33, [1, 0] : vector<8x8xbf16> -> vector<8x8xbf16>
    %cst_21 = arith.constant dense<0.000000e+00> : vector<8x8xf32>
    %37 = tpu.matmul %31, %36, %cst_21 {dimension_numbers = #tpu.dot_dimension_numbers<[1], [0], [0], [1], [0, 0, 1, 1], [], []>} : vector<8x8xbf16>, vector<8x8xbf16>, vector<8x8xf32> -> vector<8x8xf32>
    %38 = arith.mulf %37, %29 : vector<8x8xf32>
    %c0_22 = arith.constant 0 : index
    %c0_23 = arith.constant 0 : index
    %c0_24 = arith.constant 0 : index
    %39 = vector.load %arg1[%c0_22, %c0_23, %c0_24] : memref<4x8x8xbf16, #tpu.memory_space<vmem>>, vector<1x8x8xbf16>
    %40 = vector.shape_cast %39 : vector<1x8x8xbf16> to vector<8x8xbf16>
    %41 = arith.extf %40 : vector<8x8xbf16> to vector<8x8xf32>
    %42 = arith.mulf %38, %41 : vector<8x8xf32>
    %cst_25 = arith.constant -1.000000e+32 : f32
    %43 = vector.broadcast %cst_25 : f32 to vector<8x8xf32>
    %44 = arith.select %26, %43, %42 : vector<8x8xi1>, vector<8x8xf32>
    %cst_26 = arith.constant dense<0xFF800000> : vector<8xf32>
    %45 = vector.multi_reduction <maximumf>, %44, %cst_26 [1] : vector<8x8xf32> to vector<8xf32>
    %46 = vector.shape_cast %45 : vector<8xf32> to vector<8x1xf32>
    %47 = vector.broadcast %46 : vector<8x1xf32> to vector<8x8xf32>
    %48 = arith.subf %44, %47 : vector<8x8xf32>
    %49 = math.exp %48 : vector<8x8xf32>
    %cst_27 = arith.constant dense<0.000000e+00> : vector<8xf32>
    %50 = vector.multi_reduction <add>, %49, %cst_27 [1] : vector<8x8xf32> to vector<8xf32>
    %51 = vector.shape_cast %50 : vector<8xf32> to vector<8x1xf32>
    %52 = tpu.reciprocal %51 {approx = true} : vector<8x1xf32> -> vector<8x1xf32>
    %53 = vector.broadcast %52 : vector<8x1xf32> to vector<8x8xf32>
    %54 = arith.mulf %49, %53 : vector<8x8xf32>
    %55 = arith.truncf %54 : vector<8x8xf32> to vector<8x8xbf16>
    %cst_28 = arith.constant dense<0.000000e+00> : vector<8x8xf32>
    %56 = tpu.matmul %55, %35, %cst_28 {dimension_numbers = #tpu.dot_dimension_numbers<[1], [0], [0], [1], [0, 0, 1, 1], [], []>} : vector<8x8xbf16>, vector<8x8xbf16>, vector<8x8xf32> -> vector<8x8xf32>
    %c0_29 = arith.constant 0 : index
    %c0_30 = arith.constant 0 : index
    %57 = vector.load %arg13[%c0_29, %c0_30] : memref<8x32xf32, #tpu.memory_space<vmem>>, vector<8x8xf32>
    tpu.vector_store %arg13[%c0_29, %c0_30], %56 {strides = array<i32>} : memref<8x32xf32, #tpu.memory_space<vmem>>, vector<8x8xf32>,
    %58 = vector.extract_strided_slice %10 {offsets = [0, 8], sizes = [8, 8], strides = [1, 1]} : vector<8x32xf32> to vector<8x8xf32>
    %59 = arith.truncf %58 : vector<8x8xf32> to vector<8x8xbf16>
    %60 = vector.extract_strided_slice %16 {offsets = [0, 8], sizes = [8, 8], strides = [1, 1]} : vector<8x32xf32> to vector<8x8xf32>
    %61 = arith.truncf %60 : vector<8x8xf32> to vector<8x8xbf16>
    %62 = vector.extract_strided_slice %23 {offsets = [0, 8], sizes = [8, 8], strides = [1, 1]} : vector<8x32xf32> to vector<8x8xf32>
    %63 = arith.truncf %62 : vector<8x8xf32> to vector<8x8xbf16>
    %64 = tpu.transpose %61, [1, 0] : vector<8x8xbf16> -> vector<8x8xbf16>
    %cst_31 = arith.constant dense<0.000000e+00> : vector<8x8xf32>
    %65 = tpu.matmul %59, %64, %cst_31 {dimension_numbers = #tpu.dot_dimension_numbers<[1], [0], [0], [1], [0, 0, 1, 1], [], []>} : vector<8x8xbf16>, vector<8x8xbf16>, vector<8x8xf32> -> vector<8x8xf32>
    %66 = arith.mulf %65, %29 : vector<8x8xf32>
    %c1 = arith.constant 1 : index
    %c0_32 = arith.constant 0 : index
    %c0_33 = arith.constant 0 : index
    %67 = vector.load %arg1[%c1, %c0_32, %c0_33] : memref<4x8x8xbf16, #tpu.memory_space<vmem>>, vector<1x8x8xbf16>
    %68 = vector.shape_cast %67 : vector<1x8x8xbf16> to vector<8x8xbf16>
    %69 = arith.extf %68 : vector<8x8xbf16> to vector<8x8xf32>
    %70 = arith.mulf %66, %69 : vector<8x8xf32>
    %cst_34 = arith.constant -1.000000e+32 : f32
    %71 = vector.broadcast %cst_34 : f32 to vector<8x8xf32>
    %72 = arith.select %26, %71, %70 : vector<8x8xi1>, vector<8x8xf32>
    %cst_35 = arith.constant dense<0xFF800000> : vector<8xf32>
    %73 = vector.multi_reduction <maximumf>, %72, %cst_35 [1] : vector<8x8xf32> to vector<8xf32>
    %74 = vector.shape_cast %73 : vector<8xf32> to vector<8x1xf32>
    %75 = vector.broadcast %74 : vector<8x1xf32> to vector<8x8xf32>
    %76 = arith.subf %72, %75 : vector<8x8xf32>
    %77 = math.exp %76 : vector<8x8xf32>
    %cst_36 = arith.constant dense<0.000000e+00> : vector<8xf32>
    %78 = vector.multi_reduction <add>, %77, %cst_36 [1] : vector<8x8xf32> to vector<8xf32>
    %79 = vector.shape_cast %78 : vector<8xf32> to vector<8x1xf32>
    %80 = tpu.reciprocal %79 {approx = true} : vector<8x1xf32> -> vector<8x1xf32>
    %81 = vector.broadcast %80 : vector<8x1xf32> to vector<8x8xf32>
    %82 = arith.mulf %77, %81 : vector<8x8xf32>
    %83 = arith.truncf %82 : vector<8x8xf32> to vector<8x8xbf16>
    %cst_37 = arith.constant dense<0.000000e+00> : vector<8x8xf32>
    %84 = tpu.matmul %83, %63, %cst_37 {dimension_numbers = #tpu.dot_dimension_numbers<[1], [0], [0], [1], [0, 0, 1, 1], [], []>} : vector<8x8xbf16>, vector<8x8xbf16>, vector<8x8xf32> -> vector<8x8xf32>
    %c0_38 = arith.constant 0 : index
    %c8 = arith.constant 8 : index
    %85 = vector.load %arg13[%c0_38, %c8] : memref<8x32xf32, #tpu.memory_space<vmem>>, vector<8x8xf32>
    tpu.vector_store %arg13[%c0_38, %c8], %84 {strides = array<i32>} : memref<8x32xf32, #tpu.memory_space<vmem>>, vector<8x8xf32>,
    %86 = vector.extract_strided_slice %10 {offsets = [0, 16], sizes = [8, 8], strides = [1, 1]} : vector<8x32xf32> to vector<8x8xf32>
    %87 = arith.truncf %86 : vector<8x8xf32> to vector<8x8xbf16>
    %88 = vector.extract_strided_slice %16 {offsets = [0, 16], sizes = [8, 8], strides = [1, 1]} : vector<8x32xf32> to vector<8x8xf32>
    %89 = arith.truncf %88 : vector<8x8xf32> to vector<8x8xbf16>
    %90 = vector.extract_strided_slice %23 {offsets = [0, 16], sizes = [8, 8], strides = [1, 1]} : vector<8x32xf32> to vector<8x8xf32>
    %91 = arith.truncf %90 : vector<8x8xf32> to vector<8x8xbf16>
    %92 = tpu.transpose %89, [1, 0] : vector<8x8xbf16> -> vector<8x8xbf16>
    %cst_39 = arith.constant dense<0.000000e+00> : vector<8x8xf32>
    %93 = tpu.matmul %87, %92, %cst_39 {dimension_numbers = #tpu.dot_dimension_numbers<[1], [0], [0], [1], [0, 0, 1, 1], [], []>} : vector<8x8xbf16>, vector<8x8xbf16>, vector<8x8xf32> -> vector<8x8xf32>
    %94 = arith.mulf %93, %29 : vector<8x8xf32>
    %c2 = arith.constant 2 : index
    %c0_40 = arith.constant 0 : index
    %c0_41 = arith.constant 0 : index
    %95 = vector.load %arg1[%c2, %c0_40, %c0_41] : memref<4x8x8xbf16, #tpu.memory_space<vmem>>, vector<1x8x8xbf16>
    %96 = vector.shape_cast %95 : vector<1x8x8xbf16> to vector<8x8xbf16>
    %97 = arith.extf %96 : vector<8x8xbf16> to vector<8x8xf32>
    %98 = arith.mulf %94, %97 : vector<8x8xf32>
    %cst_42 = arith.constant -1.000000e+32 : f32
    %99 = vector.broadcast %cst_42 : f32 to vector<8x8xf32>
    %100 = arith.select %26, %99, %98 : vector<8x8xi1>, vector<8x8xf32>
    %cst_43 = arith.constant dense<0xFF800000> : vector<8xf32>
    %101 = vector.multi_reduction <maximumf>, %100, %cst_43 [1] : vector<8x8xf32> to vector<8xf32>
    %102 = vector.shape_cast %101 : vector<8xf32> to vector<8x1xf32>
    %103 = vector.broadcast %102 : vector<8x1xf32> to vector<8x8xf32>
    %104 = arith.subf %100, %103 : vector<8x8xf32>
    %105 = math.exp %104 : vector<8x8xf32>
    %cst_44 = arith.constant dense<0.000000e+00> : vector<8xf32>
    %106 = vector.multi_reduction <add>, %105, %cst_44 [1] : vector<8x8xf32> to vector<8xf32>
    %107 = vector.shape_cast %106 : vector<8xf32> to vector<8x1xf32>
    %108 = tpu.reciprocal %107 {approx = true} : vector<8x1xf32> -> vector<8x1xf32>
    %109 = vector.broadcast %108 : vector<8x1xf32> to vector<8x8xf32>
    %110 = arith.mulf %105, %109 : vector<8x8xf32>
    %111 = arith.truncf %110 : vector<8x8xf32> to vector<8x8xbf16>
    %cst_45 = arith.constant dense<0.000000e+00> : vector<8x8xf32>
    %112 = tpu.matmul %111, %91, %cst_45 {dimension_numbers = #tpu.dot_dimension_numbers<[1], [0], [0], [1], [0, 0, 1, 1], [], []>} : vector<8x8xbf16>, vector<8x8xbf16>, vector<8x8xf32> -> vector<8x8xf32>
    %c0_46 = arith.constant 0 : index
    %c16 = arith.constant 16 : index
    %113 = vector.load %arg13[%c0_46, %c16] : memref<8x32xf32, #tpu.memory_space<vmem>>, vector<8x8xf32>
    tpu.vector_store %arg13[%c0_46, %c16], %112 {strides = array<i32>} : memref<8x32xf32, #tpu.memory_space<vmem>>, vector<8x8xf32>,
    %114 = vector.extract_strided_slice %10 {offsets = [0, 24], sizes = [8, 8], strides = [1, 1]} : vector<8x32xf32> to vector<8x8xf32>
    %115 = arith.truncf %114 : vector<8x8xf32> to vector<8x8xbf16>
    %116 = vector.extract_strided_slice %16 {offsets = [0, 24], sizes = [8, 8], strides = [1, 1]} : vector<8x32xf32> to vector<8x8xf32>
    %117 = arith.truncf %116 : vector<8x8xf32> to vector<8x8xbf16>
    %118 = vector.extract_strided_slice %23 {offsets = [0, 24], sizes = [8, 8], strides = [1, 1]} : vector<8x32xf32> to vector<8x8xf32>
    %119 = arith.truncf %118 : vector<8x8xf32> to vector<8x8xbf16>
    %120 = tpu.transpose %117, [1, 0] : vector<8x8xbf16> -> vector<8x8xbf16>
    %cst_47 = arith.constant dense<0.000000e+00> : vector<8x8xf32>
    %121 = tpu.matmul %115, %120, %cst_47 {dimension_numbers = #tpu.dot_dimension_numbers<[1], [0], [0], [1], [0, 0, 1, 1], [], []>} : vector<8x8xbf16>, vector<8x8xbf16>, vector<8x8xf32> -> vector<8x8xf32>
    %122 = arith.mulf %121, %29 : vector<8x8xf32>
    %c3 = arith.constant 3 : index
    %c0_48 = arith.constant 0 : index
    %c0_49 = arith.constant 0 : index
    %123 = vector.load %arg1[%c3, %c0_48, %c0_49] : memref<4x8x8xbf16, #tpu.memory_space<vmem>>, vector<1x8x8xbf16>
    %124 = vector.shape_cast %123 : vector<1x8x8xbf16> to vector<8x8xbf16>
    %125 = arith.extf %124 : vector<8x8xbf16> to vector<8x8xf32>
    %126 = arith.mulf %122, %125 : vector<8x8xf32>
    %cst_50 = arith.constant -1.000000e+32 : f32
    %127 = vector.broadcast %cst_50 : f32 to vector<8x8xf32>
    %128 = arith.select %26, %127, %126 : vector<8x8xi1>, vector<8x8xf32>
    %cst_51 = arith.constant dense<0xFF800000> : vector<8xf32>
    %129 = vector.multi_reduction <maximumf>, %128, %cst_51 [1] : vector<8x8xf32> to vector<8xf32>
    %130 = vector.shape_cast %129 : vector<8xf32> to vector<8x1xf32>
    %131 = vector.broadcast %130 : vector<8x1xf32> to vector<8x8xf32>
    %132 = arith.subf %128, %131 : vector<8x8xf32>
    %133 = math.exp %132 : vector<8x8xf32>
    %cst_52 = arith.constant dense<0.000000e+00> : vector<8xf32>
    %134 = vector.multi_reduction <add>, %133, %cst_52 [1] : vector<8x8xf32> to vector<8xf32>
    %135 = vector.shape_cast %134 : vector<8xf32> to vector<8x1xf32>
    %136 = tpu.reciprocal %135 {approx = true} : vector<8x1xf32> -> vector<8x1xf32>
    %137 = vector.broadcast %136 : vector<8x1xf32> to vector<8x8xf32>
    %138 = arith.mulf %133, %137 : vector<8x8xf32>
    %139 = arith.truncf %138 : vector<8x8xf32> to vector<8x8xbf16>
    %cst_53 = arith.constant dense<0.000000e+00> : vector<8x8xf32>
    %140 = tpu.matmul %139, %119, %cst_53 {dimension_numbers = #tpu.dot_dimension_numbers<[1], [0], [0], [1], [0, 0, 1, 1], [], []>} : vector<8x8xbf16>, vector<8x8xbf16>, vector<8x8xf32> -> vector<8x8xf32>
    %c0_54 = arith.constant 0 : index
    %c24 = arith.constant 24 : index
    %141 = vector.load %arg13[%c0_54, %c24] : memref<8x32xf32, #tpu.memory_space<vmem>>, vector<8x8xf32>
    tpu.vector_store %arg13[%c0_54, %c24], %140 {strides = array<i32>} : memref<8x32xf32, #tpu.memory_space<vmem>>, vector<8x8xf32>,
    %cst_55 = arith.constant 0.000000e+00 : f32
    %142 = vector.broadcast %cst_55 : f32 to vector<1x32xf32>
    %c0_56 = arith.constant 0 : index
    %c0_57 = arith.constant 0 : index
    %143 = vector.load %arg13[%c0_56, %c0_57] : memref<8x32xf32, #tpu.memory_space<vmem>>, vector<1x32xf32>
    tpu.vector_store %arg13[%c0_56, %c0_57], %142 {strides = array<i32>} : memref<8x32xf32, #tpu.memory_space<vmem>>, vector<1x32xf32>,
    %c0_58 = arith.constant 0 : index
    %c0_59 = arith.constant 0 : index
    %144 = vector.load %arg13[%c0_58, %c0_59] : memref<8x32xf32, #tpu.memory_space<vmem>>, vector<8x32xf32>
    %145 = arith.truncf %144 : vector<8x32xf32> to vector<8x32xbf16>
    %c0_60 = arith.constant 0 : index
    %c0_61 = arith.constant 0 : index
    %146 = vector.load %arg10[%c0_60, %c0_61] : memref<32x32xf32, #tpu.memory_space<vmem>>, vector<32x32xf32>
    %147 = arith.truncf %146 : vector<32x32xf32> to vector<32x32xbf16>
    %cst_62 = arith.constant dense<0.000000e+00> : vector<8x32xf32>
    %148 = tpu.matmul %145, %147, %cst_62 {dimension_numbers = #tpu.dot_dimension_numbers<[1], [0], [0], [1], [0, 0, 1, 1], [], []>} : vector<8x32xbf16>, vector<32x32xbf16>, vector<8x32xf32> -> vector<8x32xf32>
    %c0_63 = arith.constant 0 : index
    %c0_64 = arith.constant 0 : index
    %149 = vector.load %arg11[%c0_63, %c0_64] : memref<1x32xf32, #tpu.memory_space<vmem>>, vector<1x32xf32>
    %150 = vector.broadcast %149 : vector<1x32xf32> to vector<8x32xf32>
    %151 = arith.addf %148, %150 : vector<8x32xf32>
    %c0_65 = arith.constant 0 : index
    %c0_66 = arith.constant 0 : index
    %c0_67 = arith.constant 0 : index
    %152 = vector.load %arg12[%c0_65, %c0_66, %c0_67] : memref<1x8x32xf32, #tpu.memory_space<vmem>>, vector<1x8x32xf32>
    %153 = vector.shape_cast %152 : vector<1x8x32xf32> to vector<8x32xf32>
    %154 = vector.shape_cast %151 : vector<8x32xf32> to vector<1x8x32xf32>
    tpu.vector_store %arg12[%c0_65, %c0_66, %c0_67], %154 {strides = array<i32>} : memref<1x8x32xf32, #tpu.memory_space<vmem>>, vector<1x8x32xf32>,
    return
  }
  func.func @transform_0(%arg0: i32) -> (i32, i32, i32) {
    %c0_i32 = arith.constant 0 : i32
    %c0_i32_0 = arith.constant 0 : i32
    %c0_i32_1 = arith.constant 0 : i32
    %c0_i32_2 = arith.constant 0 : i32
    return %c0_i32, %c0_i32_0, %c0_i32_1 : i32, i32, i32
  }
  func.func @transform_1(%arg0: i32) -> (i32, i32, i32) {
    %c0_i32 = arith.constant 0 : i32
    %c0_i32_0 = arith.constant 0 : i32
    %c0_i32_1 = arith.constant 0 : i32
    return %arg0, %c0_i32, %c0_i32_0 : i32, i32, i32
  }
  func.func @transform_2(%arg0: i32) -> (i32, i32, i32) {
    %c0_i32 = arith.constant 0 : i32
    %c0_i32_0 = arith.constant 0 : i32
    %c0_i32_1 = arith.constant 0 : i32
    return %arg0, %c0_i32, %c0_i32_0 : i32, i32, i32
  }
  func.func @transform_3(%arg0: i32) -> (i32, i32, i32) {
    %c0_i32 = arith.constant 0 : i32
    %c0_i32_0 = arith.constant 0 : i32
    %c0_i32_1 = arith.constant 0 : i32
    return %arg0, %c0_i32, %c0_i32_0 : i32, i32, i32
  }
  func.func @transform_4(%arg0: i32) -> (i32, i32, i32) {
    %c0_i32 = arith.constant 0 : i32
    %c0_i32_0 = arith.constant 0 : i32
    %c0_i32_1 = arith.constant 0 : i32
    return %arg0, %c0_i32, %c0_i32_0 : i32, i32, i32
  }
  func.func @transform_5(%arg0: i32) -> (i32, i32) {
    %c0_i32 = arith.constant 0 : i32
    %c0_i32_0 = arith.constant 0 : i32
    %c0_i32_1 = arith.constant 0 : i32
    return %c0_i32, %c0_i32_0 : i32, i32
  }
  func.func @transform_6(%arg0: i32) -> (i32, i32) {
    %c0_i32 = arith.constant 0 : i32
    %c0_i32_0 = arith.constant 0 : i32
    %c0_i32_1 = arith.constant 0 : i32
    return %c0_i32, %c0_i32_0 : i32, i32
  }
  func.func @transform_7(%arg0: i32) -> (i32, i32) {
    %c0_i32 = arith.constant 0 : i32
    %c0_i32_0 = arith.constant 0 : i32
    %c0_i32_1 = arith.constant 0 : i32
    return %c0_i32, %c0_i32_0 : i32, i32
  }
  func.func @transform_8(%arg0: i32) -> (i32, i32) {
    %c0_i32 = arith.constant 0 : i32
    %c0_i32_0 = arith.constant 0 : i32
    %c0_i32_1 = arith.constant 0 : i32
    return %c0_i32, %c0_i32_0 : i32, i32
  }
  func.func @transform_9(%arg0: i32) -> (i32, i32) {
    %c0_i32 = arith.constant 0 : i32
    %c0_i32_0 = arith.constant 0 : i32
    %c0_i32_1 = arith.constant 0 : i32
    return %c0_i32, %c0_i32_0 : i32, i32
  }
  func.func @transform_10(%arg0: i32) -> (i32, i32) {
    %c0_i32 = arith.constant 0 : i32
    %c0_i32_0 = arith.constant 0 : i32
    %c0_i32_1 = arith.constant 0 : i32
    return %c0_i32, %c0_i32_0 : i32, i32
  }
  func.func @transform_11(%arg0: i32) -> (i32, i32, i32) {
    %c0_i32 = arith.constant 0 : i32
    %c0_i32_0 = arith.constant 0 : i32
    %c0_i32_1 = arith.constant 0 : i32
    return %arg0, %c0_i32, %c0_i32_0 : i32, i32, i32
  }
}

module attributes {stable_mosaic.version = 11 : i64} {
  func.func @_mha_fused_kernel(%arg0: i32, %arg1: memref<4x8x8xbf16, #tpu.memory_space<vmem>>, %arg2: memref<1x8x8xbf16, #tpu.memory_space<vmem>>, %arg3: memref<1x8x32xf32, #tpu.memory_space<vmem>>, %arg4: memref<1x8x32xf32, #tpu.memory_space<vmem>>, %arg5: memref<1x8x32xf32, #tpu.memory_space<vmem>>, %arg6: memref<32x32xf32, #tpu.memory_space<vmem>>, %arg7: memref<1x32xf32, #tpu.memory_space<vmem>>, %arg8: memref<32x32xf32, #tpu.memory_space<vmem>>, %arg9: memref<1x32xf32, #tpu.memory_space<vmem>>, %arg10: memref<32x32xf32, #tpu.memory_space<vmem>>, %arg11: memref<1x32xf32, #tpu.memory_space<vmem>>, %arg12: memref<1x8x32xf32, #tpu.memory_space<vmem>>, %arg13: memref<8x32xf32, #tpu.memory_space<vmem>>) attributes {dimension_semantics = [#tpu.dimension_semantics<parallel>], iteration_bounds = array<i64: 2>, scalar_prefetch = 0 : i64, scratch_operands = 1 : i64, tpu.core_type = #tpu.core_type<tc>, window_params = [{pipeline_mode = #tpu.pipeline_mode<synchronous>, transform_indices = @transform_0, window_bounds = array<i64: 4, 8, 8>}, {transform_indices = @transform_1, window_bounds = array<i64: 1, 8, 8>}, {transform_indices = @transform_2, window_bounds = array<i64: 1, 8, 32>}, {transform_indices = @transform_3, window_bounds = array<i64: 1, 8, 32>}, {transform_indices = @transform_4, window_bounds = array<i64: 1, 8, 32>}, {pipeline_mode = #tpu.pipeline_mode<synchronous>, transform_indices = @transform_5, window_bounds = array<i64: 32, 32>}, {pipeline_mode = #tpu.pipeline_mode<synchronous>, transform_indices = @transform_6, window_bounds = array<i64: 1, 32>}, {pipeline_mode = #tpu.pipeline_mode<synchronous>, transform_indices = @transform_7, window_bounds = array<i64: 32, 32>}, {pipeline_mode = #tpu.pipeline_mode<synchronous>, transform_indices = @transform_8, window_bounds = array<i64: 1, 32>}, {pipeline_mode = #tpu.pipeline_mode<synchronous>, transform_indices = @transform_9, window_bounds = array<i64: 32, 32>}, {pipeline_mode = #tpu.pipeline_mode<synchronous>, transform_indices = @transform_10, window_bounds = array<i64: 1, 32>}, {transform_indices = @transform_11, window_bounds = array<i64: 1, 8, 32>}]} {
    %c0 = arith.constant 0 : index
    %c0_0 = arith.constant 0 : index
    %0 = vector.load %arg6[%c0, %c0_0] : memref<32x32xf32, #tpu.memory_space<vmem>>, vector<32x32xf32>
    %1 = arith.truncf %0 : vector<32x32xf32> to vector<32x32xbf16>
    %c0_1 = arith.constant 0 : index
    %c0_2 = arith.constant 0 : index
    %2 = vector.load %arg8[%c0_1, %c0_2] : memref<32x32xf32, #tpu.memory_space<vmem>>, vector<32x32xf32>
    %3 = arith.truncf %2 : vector<32x32xf32> to vector<32x32xbf16>
    %c0_3 = arith.constant 0 : index
    %c0_4 = arith.constant 0 : index
    %4 = vector.load %arg7[%c0_3, %c0_4] : memref<1x32xf32, #tpu.memory_space<vmem>>, vector<1x32xf32>
    %c0_5 = arith.constant 0 : index
    %c0_6 = arith.constant 0 : index
    %c0_7 = arith.constant 0 : index
    %5 = vector.load %arg3[%c0_5, %c0_6, %c0_7] : memref<1x8x32xf32, #tpu.memory_space<vmem>>, vector<1x8x32xf32>
    %6 = vector.shape_cast %5 : vector<1x8x32xf32> to vector<8x32xf32>
    %7 = arith.truncf %6 : vector<8x32xf32> to vector<8x32xbf16>
    %cst = arith.constant dense<0.000000e+00> : vector<8x32xf32>
    %8 = tpu.matmul %7, %1, %cst {dimension_numbers = #tpu.dot_dimension_numbers<[1], [0], [0], [1], [0, 0, 1, 1], [], []>} : vector<8x32xbf16>, vector<32x32xbf16>, vector<8x32xf32> -> vector<8x32xf32>
    %9 = vector.broadcast %4 : vector<1x32xf32> to vector<8x32xf32>
    %10 = arith.addf %8, %9 : vector<8x32xf32>
    %c0_8 = arith.constant 0 : index
    %c0_9 = arith.constant 0 : index
    %c0_10 = arith.constant 0 : index
    %11 = vector.load %arg4[%c0_8, %c0_9, %c0_10] : memref<1x8x32xf32, #tpu.memory_space<vmem>>, vector<1x8x32xf32>
    %12 = vector.shape_cast %11 : vector<1x8x32xf32> to vector<8x32xf32>
    %13 = arith.truncf %12 : vector<8x32xf32> to vector<8x32xbf16>
    %cst_11 = arith.constant dense<0.000000e+00> : vector<8x32xf32>
    %14 = tpu.matmul %13, %1, %cst_11 {dimension_numbers = #tpu.dot_dimension_numbers<[1], [0], [0], [1], [0, 0, 1, 1], [], []>} : vector<8x32xbf16>, vector<32x32xbf16>, vector<8x32xf32> -> vector<8x32xf32>
    %15 = vector.broadcast %4 : vector<1x32xf32> to vector<8x32xf32>
    %16 = arith.addf %14, %15 : vector<8x32xf32>
    %c0_12 = arith.constant 0 : index
    %c0_13 = arith.constant 0 : index
    %c0_14 = arith.constant 0 : index
    %17 = vector.load %arg5[%c0_12, %c0_13, %c0_14] : memref<1x8x32xf32, #tpu.memory_space<vmem>>, vector<1x8x32xf32>
    %18 = vector.shape_cast %17 : vector<1x8x32xf32> to vector<8x32xf32>
    %19 = arith.truncf %18 : vector<8x32xf32> to vector<8x32xbf16>
    %cst_15 = arith.constant dense<0.000000e+00> : vector<8x32xf32>
    %20 = tpu.matmul %19, %3, %cst_15 {dimension_numbers = #tpu.dot_dimension_numbers<[1], [0], [0], [1], [0, 0, 1, 1], [], []>} : vector<8x32xbf16>, vector<32x32xbf16>, vector<8x32xf32> -> vector<8x32xf32>
    %c0_16 = arith.constant 0 : index
    %c0_17 = arith.constant 0 : index
    %21 = vector.load %arg9[%c0_16, %c0_17] : memref<1x32xf32, #tpu.memory_space<vmem>>, vector<1x32xf32>
    %22 = vector.broadcast %21 : vector<1x32xf32> to vector<8x32xf32>
    %23 = arith.addf %20, %22 : vector<8x32xf32>
    %24 = tpu.iota {dimensions = array<i32: 0>} : vector<8x8xi32>
    %25 = tpu.iota {dimensions = array<i32: 1>} : vector<8x8xi32>
    %26 = arith.cmpi sgt, %25, %24 : vector<8x8xi32>
    %c0_18 = arith.constant 0 : index
    %c0_19 = arith.constant 0 : index
    %c0_20 = arith.constant 0 : index
    %27 = vector.load %arg2[%c0_18, %c0_19, %c0_20] : memref<1x8x8xbf16, #tpu.memory_space<vmem>>, vector<1x8x8xbf16>
    %28 = vector.shape_cast %27 : vector<1x8x8xbf16> to vector<8x8xbf16>
    %29 = arith.extf %28 : vector<8x8xbf16> to vector<8x8xf32>
    %30 = vector.extract_strided_slice %10 {offsets = [0, 0], sizes = [8, 8], strides = [1, 1]} : vector<8x32xf32> to vector<8x8xf32>
    %31 = arith.truncf %30 : vector<8x8xf32> to vector<8x8xbf16>
    %32 = vector.extract_strided_slice %16 {offsets = [0, 0], sizes = [8, 8], strides = [1, 1]} : vector<8x32xf32> to vector<8x8xf32>
    %33 = arith.truncf %32 : vector<8x8xf32> to vector<8x8xbf16>
    %34 = vector.extract_strided_slice %23 {offsets = [0, 0], sizes = [8, 8], strides = [1, 1]} : vector<8x32xf32> to vector<8x8xf32>
    %35 = arith.truncf %34 : vector<8x8xf32> to vector<8x8xbf16>
    %36 = tpu.transpose %33, [1, 0] : vector<8x8xbf16> -> vector<8x8xbf16>
    %cst_21 = arith.constant dense<0.000000e+00> : vector<8x8xf32>
    %37 = tpu.matmul %31, %36, %cst_21 {dimension_numbers = #tpu.dot_dimension_numbers<[1], [0], [0], [1], [0, 0, 1, 1], [], []>} : vector<8x8xbf16>, vector<8x8xbf16>, vector<8x8xf32> -> vector<8x8xf32>
    %38 = arith.mulf %37, %29 : vector<8x8xf32>
    %c0_22 = arith.constant 0 : index
    %c0_23 = arith.constant 0 : index
    %c0_24 = arith.constant 0 : index
    %39 = vector.load %arg1[%c0_22, %c0_23, %c0_24] : memref<4x8x8xbf16, #tpu.memory_space<vmem>>, vector<1x8x8xbf16>
    %40 = vector.shape_cast %39 : vector<1x8x8xbf16> to vector<8x8xbf16>
    %41 = arith.extf %40 : vector<8x8xbf16> to vector<8x8xf32>
    %42 = arith.mulf %38, %41 : vector<8x8xf32>
    %cst_25 = arith.constant -1.000000e+32 : f32
    %43 = vector.broadcast %cst_25 : f32 to vector<8x8xf32>
    %44 = arith.select %26, %43, %42 : vector<8x8xi1>, vector<8x8xf32>
    %cst_26 = arith.constant dense<0xFF800000> : vector<8xf32>
    %45 = vector.multi_reduction <maximumf>, %44, %cst_26 [1] : vector<8x8xf32> to vector<8xf32>
    %46 = vector.shape_cast %45 : vector<8xf32> to vector<8x1xf32>
    %47 = vector.broadcast %46 : vector<8x1xf32> to vector<8x8xf32>
    %48 = arith.subf %44, %47 : vector<8x8xf32>
    %49 = math.exp %48 : vector<8x8xf32>
    %cst_27 = arith.constant dense<0.000000e+00> : vector<8xf32>
    %50 = vector.multi_reduction <add>, %49, %cst_27 [1] : vector<8x8xf32> to vector<8xf32>
    %51 = vector.shape_cast %50 : vector<8xf32> to vector<8x1xf32>
    %52 = tpu.reciprocal %51 {approx = true} : vector<8x1xf32> -> vector<8x1xf32>
    %53 = vector.broadcast %52 : vector<8x1xf32> to vector<8x8xf32>
    %54 = arith.mulf %49, %53 : vector<8x8xf32>
    %55 = arith.truncf %54 : vector<8x8xf32> to vector<8x8xbf16>
    %cst_28 = arith.constant dense<0.000000e+00> : vector<8x8xf32>
    %56 = tpu.matmul %55, %35, %cst_28 {dimension_numbers = #tpu.dot_dimension_numbers<[1], [0], [0], [1], [0, 0, 1, 1], [], []>} : vector<8x8xbf16>, vector<8x8xbf16>, vector<8x8xf32> -> vector<8x8xf32>
    %c0_29 = arith.constant 0 : index
    %c0_30 = arith.constant 0 : index
    %57 = vector.load %arg13[%c0_29, %c0_30] : memref<8x32xf32, #tpu.memory_space<vmem>>, vector<8x8xf32>
    tpu.vector_store %arg13[%c0_29, %c0_30], %56 {strides = array<i32>} : memref<8x32xf32, #tpu.memory_space<vmem>>, vector<8x8xf32>,
    %58 = vector.extract_strided_slice %10 {offsets = [0, 8], sizes = [8, 8], strides = [1, 1]} : vector<8x32xf32> to vector<8x8xf32>
    %59 = arith.truncf %58 : vector<8x8xf32> to vector<8x8xbf16>
    %60 = vector.extract_strided_slice %16 {offsets = [0, 8], sizes = [8, 8], strides = [1, 1]} : vector<8x32xf32> to vector<8x8xf32>
    %61 = arith.truncf %60 : vector<8x8xf32> to vector<8x8xbf16>
    %62 = vector.extract_strided_slice %23 {offsets = [0, 8], sizes = [8, 8], strides = [1, 1]} : vector<8x32xf32> to vector<8x8xf32>
    %63 = arith.truncf %62 : vector<8x8xf32> to vector<8x8xbf16>
    %64 = tpu.transpose %61, [1, 0] : vector<8x8xbf16> -> vector<8x8xbf16>
    %cst_31 = arith.constant dense<0.000000e+00> : vector<8x8xf32>
    %65 = tpu.matmul %59, %64, %cst_31 {dimension_numbers = #tpu.dot_dimension_numbers<[1], [0], [0], [1], [0, 0, 1, 1], [], []>} : vector<8x8xbf16>, vector<8x8xbf16>, vector<8x8xf32> -> vector<8x8xf32>
    %66 = arith.mulf %65, %29 : vector<8x8xf32>
    %c1 = arith.constant 1 : index
    %c0_32 = arith.constant 0 : index
    %c0_33 = arith.constant 0 : index
    %67 = vector.load %arg1[%c1, %c0_32, %c0_33] : memref<4x8x8xbf16, #tpu.memory_space<vmem>>, vector<1x8x8xbf16>
    %68 = vector.shape_cast %67 : vector<1x8x8xbf16> to vector<8x8xbf16>
    %69 = arith.extf %68 : vector<8x8xbf16> to vector<8x8xf32>
    %70 = arith.mulf %66, %69 : vector<8x8xf32>
    %cst_34 = arith.constant -1.000000e+32 : f32
    %71 = vector.broadcast %cst_34 : f32 to vector<8x8xf32>
    %72 = arith.select %26, %71, %70 : vector<8x8xi1>, vector<8x8xf32>
    %cst_35 = arith.constant dense<0xFF800000> : vector<8xf32>
    %73 = vector.multi_reduction <maximumf>, %72, %cst_35 [1] : vector<8x8xf32> to vector<8xf32>
    %74 = vector.shape_cast %73 : vector<8xf32> to vector<8x1xf32>
    %75 = vector.broadcast %74 : vector<8x1xf32> to vector<8x8xf32>
    %76 = arith.subf %72, %75 : vector<8x8xf32>
    %77 = math.exp %76 : vector<8x8xf32>
    %cst_36 = arith.constant dense<0.000000e+00> : vector<8xf32>
    %78 = vector.multi_reduction <add>, %77, %cst_36 [1] : vector<8x8xf32> to vector<8xf32>
    %79 = vector.shape_cast %78 : vector<8xf32> to vector<8x1xf32>
    %80 = tpu.reciprocal %79 {approx = true} : vector<8x1xf32> -> vector<8x1xf32>
    %81 = vector.broadcast %80 : vector<8x1xf32> to vector<8x8xf32>
    %82 = arith.mulf %77, %81 : vector<8x8xf32>
    %83 = arith.truncf %82 : vector<8x8xf32> to vector<8x8xbf16>
    %cst_37 = arith.constant dense<0.000000e+00> : vector<8x8xf32>
    %84 = tpu.matmul %83, %63, %cst_37 {dimension_numbers = #tpu.dot_dimension_numbers<[1], [0], [0], [1], [0, 0, 1, 1], [], []>} : vector<8x8xbf16>, vector<8x8xbf16>, vector<8x8xf32> -> vector<8x8xf32>
    %c0_38 = arith.constant 0 : index
    %c8 = arith.constant 8 : index
    %85 = vector.load %arg13[%c0_38, %c8] : memref<8x32xf32, #tpu.memory_space<vmem>>, vector<8x8xf32>
    tpu.vector_store %arg13[%c0_38, %c8], %84 {strides = array<i32>} : memref<8x32xf32, #tpu.memory_space<vmem>>, vector<8x8xf32>,
    %86 = vector.extract_strided_slice %10 {offsets = [0, 16], sizes = [8, 8], strides = [1, 1]} : vector<8x32xf32> to vector<8x8xf32>
    %87 = arith.truncf %86 : vector<8x8xf32> to vector<8x8xbf16>
    %88 = vector.extract_strided_slice %16 {offsets = [0, 16], sizes = [8, 8], strides = [1, 1]} : vector<8x32xf32> to vector<8x8xf32>
    %89 = arith.truncf %88 : vector<8x8xf32> to vector<8x8xbf16>
    %90 = vector.extract_strided_slice %23 {offsets = [0, 16], sizes = [8, 8], strides = [1, 1]} : vector<8x32xf32> to vector<8x8xf32>
    %91 = arith.truncf %90 : vector<8x8xf32> to vector<8x8xbf16>
    %92 = tpu.transpose %89, [1, 0] : vector<8x8xbf16> -> vector<8x8xbf16>
    %cst_39 = arith.constant dense<0.000000e+00> : vector<8x8xf32>
    %93 = tpu.matmul %87, %92, %cst_39 {dimension_numbers = #tpu.dot_dimension_numbers<[1], [0], [0], [1], [0, 0, 1, 1], [], []>} : vector<8x8xbf16>, vector<8x8xbf16>, vector<8x8xf32> -> vector<8x8xf32>
    %94 = arith.mulf %93, %29 : vector<8x8xf32>
    %c2 = arith.constant 2 : index
    %c0_40 = arith.constant 0 : index
    %c0_41 = arith.constant 0 : index
    %95 = vector.load %arg1[%c2, %c0_40, %c0_41] : memref<4x8x8xbf16, #tpu.memory_space<vmem>>, vector<1x8x8xbf16>
    %96 = vector.shape_cast %95 : vector<1x8x8xbf16> to vector<8x8xbf16>
    %97 = arith.extf %96 : vector<8x8xbf16> to vector<8x8xf32>
    %98 = arith.mulf %94, %97 : vector<8x8xf32>
    %cst_42 = arith.constant -1.000000e+32 : f32
    %99 = vector.broadcast %cst_42 : f32 to vector<8x8xf32>
    %100 = arith.select %26, %99, %98 : vector<8x8xi1>, vector<8x8xf32>
    %cst_43 = arith.constant dense<0xFF800000> : vector<8xf32>
    %101 = vector.multi_reduction <maximumf>, %100, %cst_43 [1] : vector<8x8xf32> to vector<8xf32>
    %102 = vector.shape_cast %101 : vector<8xf32> to vector<8x1xf32>
    %103 = vector.broadcast %102 : vector<8x1xf32> to vector<8x8xf32>
    %104 = arith.subf %100, %103 : vector<8x8xf32>
    %105 = math.exp %104 : vector<8x8xf32>
    %cst_44 = arith.constant dense<0.000000e+00> : vector<8xf32>
    %106 = vector.multi_reduction <add>, %105, %cst_44 [1] : vector<8x8xf32> to vector<8xf32>
    %107 = vector.shape_cast %106 : vector<8xf32> to vector<8x1xf32>
    %108 = tpu.reciprocal %107 {approx = true} : vector<8x1xf32> -> vector<8x1xf32>
    %109 = vector.broadcast %108 : vector<8x1xf32> to vector<8x8xf32>
    %110 = arith.mulf %105, %109 : vector<8x8xf32>
    %111 = arith.truncf %110 : vector<8x8xf32> to vector<8x8xbf16>
    %cst_45 = arith.constant dense<0.000000e+00> : vector<8x8xf32>
    %112 = tpu.matmul %111, %91, %cst_45 {dimension_numbers = #tpu.dot_dimension_numbers<[1], [0], [0], [1], [0, 0, 1, 1], [], []>} : vector<8x8xbf16>, vector<8x8xbf16>, vector<8x8xf32> -> vector<8x8xf32>
    %c0_46 = arith.constant 0 : index
    %c16 = arith.constant 16 : index
    %113 = vector.load %arg13[%c0_46, %c16] : memref<8x32xf32, #tpu.memory_space<vmem>>, vector<8x8xf32>
    tpu.vector_store %arg13[%c0_46, %c16], %112 {strides = array<i32>} : memref<8x32xf32, #tpu.memory_space<vmem>>, vector<8x8xf32>,
    %114 = vector.extract_strided_slice %10 {offsets = [0, 24], sizes = [8, 8], strides = [1, 1]} : vector<8x32xf32> to vector<8x8xf32>
    %115 = arith.truncf %114 : vector<8x8xf32> to vector<8x8xbf16>
    %116 = vector.extract_strided_slice %16 {offsets = [0, 24], sizes = [8, 8], strides = [1, 1]} : vector<8x32xf32> to vector<8x8xf32>
    %117 = arith.truncf %116 : vector<8x8xf32> to vector<8x8xbf16>
    %118 = vector.extract_strided_slice %23 {offsets = [0, 24], sizes = [8, 8], strides = [1, 1]} : vector<8x32xf32> to vector<8x8xf32>
    %119 = arith.truncf %118 : vector<8x8xf32> to vector<8x8xbf16>
    %120 = tpu.transpose %117, [1, 0] : vector<8x8xbf16> -> vector<8x8xbf16>
    %cst_47 = arith.constant dense<0.000000e+00> : vector<8x8xf32>
    %121 = tpu.matmul %115, %120, %cst_47 {dimension_numbers = #tpu.dot_dimension_numbers<[1], [0], [0], [1], [0, 0, 1, 1], [], []>} : vector<8x8xbf16>, vector<8x8xbf16>, vector<8x8xf32> -> vector<8x8xf32>
    %122 = arith.mulf %121, %29 : vector<8x8xf32>
    %c3 = arith.constant 3 : index
    %c0_48 = arith.constant 0 : index
    %c0_49 = arith.constant 0 : index
    %123 = vector.load %arg1[%c3, %c0_48, %c0_49] : memref<4x8x8xbf16, #tpu.memory_space<vmem>>, vector<1x8x8xbf16>
    %124 = vector.shape_cast %123 : vector<1x8x8xbf16> to vector<8x8xbf16>
    %125 = arith.extf %124 : vector<8x8xbf16> to vector<8x8xf32>
    %126 = arith.mulf %122, %125 : vector<8x8xf32>
    %cst_50 = arith.constant -1.000000e+32 : f32
    %127 = vector.broadcast %cst_50 : f32 to vector<8x8xf32>
    %128 = arith.select %26, %127, %126 : vector<8x8xi1>, vector<8x8xf32>
    %cst_51 = arith.constant dense<0xFF800000> : vector<8xf32>
    %129 = vector.multi_reduction <maximumf>, %128, %cst_51 [1] : vector<8x8xf32> to vector<8xf32>
    %130 = vector.shape_cast %129 : vector<8xf32> to vector<8x1xf32>
    %131 = vector.broadcast %130 : vector<8x1xf32> to vector<8x8xf32>
    %132 = arith.subf %128, %131 : vector<8x8xf32>
    %133 = math.exp %132 : vector<8x8xf32>
    %cst_52 = arith.constant dense<0.000000e+00> : vector<8xf32>
    %134 = vector.multi_reduction <add>, %133, %cst_52 [1] : vector<8x8xf32> to vector<8xf32>
    %135 = vector.shape_cast %134 : vector<8xf32> to vector<8x1xf32>
    %136 = tpu.reciprocal %135 {approx = true} : vector<8x1xf32> -> vector<8x1xf32>
    %137 = vector.broadcast %136 : vector<8x1xf32> to vector<8x8xf32>
    %138 = arith.mulf %133, %137 : vector<8x8xf32>
    %139 = arith.truncf %138 : vector<8x8xf32> to vector<8x8xbf16>
    %cst_53 = arith.constant dense<0.000000e+00> : vector<8x8xf32>
    %140 = tpu.matmul %139, %119, %cst_53 {dimension_numbers = #tpu.dot_dimension_numbers<[1], [0], [0], [1], [0, 0, 1, 1], [], []>} : vector<8x8xbf16>, vector<8x8xbf16>, vector<8x8xf32> -> vector<8x8xf32>
    %c0_54 = arith.constant 0 : index
    %c24 = arith.constant 24 : index
    %141 = vector.load %arg13[%c0_54, %c24] : memref<8x32xf32, #tpu.memory_space<vmem>>, vector<8x8xf32>
    tpu.vector_store %arg13[%c0_54, %c24], %140 {strides = array<i32>} : memref<8x32xf32, #tpu.memory_space<vmem>>, vector<8x8xf32>,
    %cst_55 = arith.constant 0.000000e+00 : f32
    %142 = vector.broadcast %cst_55 : f32 to vector<1x32xf32>
    %c0_56 = arith.constant 0 : index
    %c0_57 = arith.constant 0 : index
    %143 = vector.load %arg13[%c0_56, %c0_57] : memref<8x32xf32, #tpu.memory_space<vmem>>, vector<1x32xf32>
    tpu.vector_store %arg13[%c0_56, %c0_57], %142 {strides = array<i32>} : memref<8x32xf32, #tpu.memory_space<vmem>>, vector<1x32xf32>,
    %c0_58 = arith.constant 0 : index
    %c0_59 = arith.constant 0 : index
    %144 = vector.load %arg13[%c0_58, %c0_59] : memref<8x32xf32, #tpu.memory_space<vmem>>, vector<8x32xf32>
    %145 = arith.truncf %144 : vector<8x32xf32> to vector<8x32xbf16>
    %c0_60 = arith.constant 0 : index
    %c0_61 = arith.constant 0 : index
    %146 = vector.load %arg10[%c0_60, %c0_61] : memref<32x32xf32, #tpu.memory_space<vmem>>, vector<32x32xf32>
    %147 = arith.truncf %146 : vector<32x32xf32> to vector<32x32xbf16>
    %cst_62 = arith.constant dense<0.000000e+00> : vector<8x32xf32>
    %148 = tpu.matmul %145, %147, %cst_62 {dimension_numbers = #tpu.dot_dimension_numbers<[1], [0], [0], [1], [0, 0, 1, 1], [], []>} : vector<8x32xbf16>, vector<32x32xbf16>, vector<8x32xf32> -> vector<8x32xf32>
    %c0_63 = arith.constant 0 : index
    %c0_64 = arith.constant 0 : index
    %149 = vector.load %arg11[%c0_63, %c0_64] : memref<1x32xf32, #tpu.memory_space<vmem>>, vector<1x32xf32>
    %150 = vector.broadcast %149 : vector<1x32xf32> to vector<8x32xf32>
    %151 = arith.addf %148, %150 : vector<8x32xf32>
    %c0_65 = arith.constant 0 : index
    %c0_66 = arith.constant 0 : index
    %c0_67 = arith.constant 0 : index
    %152 = vector.load %arg12[%c0_65, %c0_66, %c0_67] : memref<1x8x32xf32, #tpu.memory_space<vmem>>, vector<1x8x32xf32>
    %153 = vector.shape_cast %152 : vector<1x8x32xf32> to vector<8x32xf32>
    %154 = vector.shape_cast %151 : vector<8x32xf32> to vector<1x8x32xf32>
    tpu.vector_store %arg12[%c0_65, %c0_66, %c0_67], %154 {strides = array<i32>} : memref<1x8x32xf32, #tpu.memory_space<vmem>>, vector<1x8x32xf32>,
    return
  }
  func.func @transform_0(%arg0: i32) -> (i32, i32, i32) {
    %c0_i32 = arith.constant 0 : i32
    %c0_i32_0 = arith.constant 0 : i32
    %c0_i32_1 = arith.constant 0 : i32
    %c0_i32_2 = arith.constant 0 : i32
    return %c0_i32, %c0_i32_0, %c0_i32_1 : i32, i32, i32
  }
  func.func @transform_1(%arg0: i32) -> (i32, i32, i32) {
    %c0_i32 = arith.constant 0 : i32
    %c0_i32_0 = arith.constant 0 : i32
    %c0_i32_1 = arith.constant 0 : i32
    return %arg0, %c0_i32, %c0_i32_0 : i32, i32, i32
  }
  func.func @transform_2(%arg0: i32) -> (i32, i32, i32) {
    %c0_i32 = arith.constant 0 : i32
    %c0_i32_0 = arith.constant 0 : i32
    %c0_i32_1 = arith.constant 0 : i32
    return %arg0, %c0_i32, %c0_i32_0 : i32, i32, i32
  }
  func.func @transform_3(%arg0: i32) -> (i32, i32, i32) {
    %c0_i32 = arith.constant 0 : i32
    %c0_i32_0 = arith.constant 0 : i32
    %c0_i32_1 = arith.constant 0 : i32
    return %arg0, %c0_i32, %c0_i32_0 : i32, i32, i32
  }
  func.func @transform_4(%arg0: i32) -> (i32, i32, i32) {
    %c0_i32 = arith.constant 0 : i32
    %c0_i32_0 = arith.constant 0 : i32
    %c0_i32_1 = arith.constant 0 : i32
    return %arg0, %c0_i32, %c0_i32_0 : i32, i32, i32
  }
  func.func @transform_5(%arg0: i32) -> (i32, i32) {
    %c0_i32 = arith.constant 0 : i32
    %c0_i32_0 = arith.constant 0 : i32
    %c0_i32_1 = arith.constant 0 : i32
    return %c0_i32, %c0_i32_0 : i32, i32
  }
  func.func @transform_6(%arg0: i32) -> (i32, i32) {
    %c0_i32 = arith.constant 0 : i32
    %c0_i32_0 = arith.constant 0 : i32
    %c0_i32_1 = arith.constant 0 : i32
    return %c0_i32, %c0_i32_0 : i32, i32
  }
  func.func @transform_7(%arg0: i32) -> (i32, i32) {
    %c0_i32 = arith.constant 0 : i32
    %c0_i32_0 = arith.constant 0 : i32
    %c0_i32_1 = arith.constant 0 : i32
    return %c0_i32, %c0_i32_0 : i32, i32
  }
  func.func @transform_8(%arg0: i32) -> (i32, i32) {
    %c0_i32 = arith.constant 0 : i32
    %c0_i32_0 = arith.constant 0 : i32
    %c0_i32_1 = arith.constant 0 : i32
    return %c0_i32, %c0_i32_0 : i32, i32
  }
  func.func @transform_9(%arg0: i32) -> (i32, i32) {
    %c0_i32 = arith.constant 0 : i32
    %c0_i32_0 = arith.constant 0 : i32
    %c0_i32_1 = arith.constant 0 : i32
    return %c0_i32, %c0_i32_0 : i32, i32
  }
  func.func @transform_10(%arg0: i32) -> (i32, i32) {
    %c0_i32 = arith.constant 0 : i32
    %c0_i32_0 = arith.constant 0 : i32
    %c0_i32_1 = arith.constant 0 : i32
    return %c0_i32, %c0_i32_0 : i32, i32
  }
  func.func @transform_11(%arg0: i32) -> (i32, i32, i32) {
    %c0_i32 = arith.constant 0 : i32
    %c0_i32_0 = arith.constant 0 : i32
    %c0_i32_1 = arith.constant 0 : i32
    return %arg0, %c0_i32, %c0_i32_0 : i32, i32, i32
  }
}

</mosaic_0001>

<llo_original>
// kernel: tpu_custom_call.1
$region0: #{tpu_custom_call.1}
  #allocation0 [shape = 'u32[]', space=smem, size = 0x4, offset = 0x4, fixed_abs, tag = 'smem constant byte address 0x4 - core index']
  #allocation1 [shape = 'u32[72,128]{1,0:T(1,128)}', space=vmem, size = 0x9000, scoped, tag = 'internal scratch']
  #allocation2 [shape = 'f32[8,32]{1,0:T(8,128)}', space=vmem, size = 0x1000, scoped, tag = 'scratch operand']
  %s0 = inlined_call_operand.hbm [shape: bf16[4,8,8], index: 0, kind: input, shape index: {}]
  %s1 = inlined_call_operand.hbm [shape: bf16[2,8,8], index: 1, kind: input, shape index: {}]
  %s2 = inlined_call_operand.hbm [shape: f32[2,8,32], index: 2, kind: input, shape index: {}]
  %s3 = inlined_call_operand.hbm [shape: f32[2,8,32], index: 3, kind: input, shape index: {}]
  %s4 = inlined_call_operand.hbm [shape: f32[2,8,32], index: 4, kind: input, shape index: {}]
  %s5 = inlined_call_operand.hbm [shape: f32[32,32], index: 5, kind: input, shape index: {}]
  %s6 = inlined_call_operand.vmem [shape: f32[1,32], index: 6, kind: input, shape index: {}]
  %s7 = inlined_call_operand.hbm [shape: f32[32,32], index: 7, kind: input, shape index: {}]
  %s8 = inlined_call_operand.vmem [shape: f32[1,32], index: 8, kind: input, shape index: {}]
  %s9 = inlined_call_operand.hbm [shape: f32[32,32], index: 9, kind: input, shape index: {}]
  %s10 = inlined_call_operand.vmem [shape: f32[1,32], index: 10, kind: input, shape index: {}]
  %s11 = inlined_call_operand.hbm [shape: f32[2,8,32], index: 11, kind: output, shape index: {}]
  %s12 = sld [smem:[#allocation0]]
  $region109: #{tpu_custom_call.1} parent=0
    _
  %s14 = ssub.s32 1, %s12
  %s15 = scalar_select 0, %s14, %s12
  $region1: #{tpu_custom_call.1} parent=0
    #allocation3 [shape = 'u8[8192]{0}', space=vmem, size = 0x2000, scoped, tag = 'input window, operand 0, single buffered']
    #allocation4 [shape = 's32[2]{0}', space=sflag, size = 0x8, scoped, tag = 'scoped memory for tpu_custom_call.1']
    #allocation5 [shape = 's32[2]{0}', space=sflag, size = 0x8, scoped, tag = 'scoped memory for tpu_custom_call.1']
    #allocation6 [shape = 'u8[4096]{0}', space=vmem, size = 0x1000, scoped, tag = 'input window, operand 1']
    #allocation7 [shape = 's32[2]{0}', space=sflag, size = 0x8, scoped, tag = 'scoped memory for tpu_custom_call.1']
    #allocation8 [shape = 'u8[8192]{0}', space=vmem, size = 0x2000, scoped, tag = 'input window, operand 2']
    #allocation9 [shape = 'u8[8192]{0}', space=vmem, size = 0x2000, scoped, tag = 'input window, operand 3']
    #allocation10 [shape = 's32[2]{0}', space=sflag, size = 0x8, scoped, tag = 'scoped memory for tpu_custom_call.1']
    #allocation11 [shape = 'u8[8192]{0}', space=vmem, size = 0x2000, scoped, tag = 'input window, operand 4']
    #allocation12 [shape = 'u8[16384]{0}', space=vmem, size = 0x4000, scoped, tag = 'input window, operand 5, single buffered']
    #allocation13 [shape = 's32[1]{0}', space=sflag, size = 0x4, scoped, tag = 'scoped memory for tpu_custom_call.1']
    #allocation14 [shape = 'u8[16384]{0}', space=vmem, size = 0x4000, scoped, tag = 'input window, operand 7, single buffered']
    #allocation15 [shape = 'u8[16384]{0}', space=vmem, size = 0x4000, scoped, tag = 'input window, operand 9, single buffered']
    #allocation16 [shape = 's32[1]{0}', space=sflag, size = 0x4, scoped, tag = 'scoped memory for tpu_custom_call.1']
    #allocation17 [shape = 'u8[8192]{0}', space=vmem, size = 0x2000, scoped, tag = 'output window, operand 0']
    %16 = vsyncpa [#allocation4], 0
    %17 = vsyncpa [#allocation7], 0
    %s18 = scalar_lea.sflag [#allocation7], 1
    %19 = vsyncpa %s18, 0
    %20 = vsyncpa [#allocation10], 0
    %s21 = scalar_lea.sflag [#allocation10], 1
    %22 = vsyncpa %s21, 0
    %23 = vsyncpa [#allocation13], 0
    %24 = vsyncpa [#allocation16], 0
    %25 = vsyncpa [#allocation5], 0
    %s26 = scalar_lea.sflag [#allocation5], 1
    %27 = vsyncpa %s26, 0
    loop: start=0, step=1, limit=4
    $region2: #{tpu_custom_call.1} parent=1 // loop_pre_header
      _
    $region3: #{tpu_custom_call.1} parent=1 // loop_header
      %s29 = sphi 0, %s33
      %p30 = scmp.ge.s32.totalorder %s29, 4
      %s37 = sphi 0, %s37
      %s39 = sphi 0, %s37
      %s40 = sphi 0, %s39
      %s54 = sphi 0, %s40
      %s60 = sphi 0, %s62
      %s63 = sphi 0, %s60
      %s64 = sphi 0, %s63
      %s80 = sphi 0, %s64
      %s86 = sphi 0, %s88
      %s89 = sphi 0, %s86
      %s90 = sphi 0, %s89
      %s106 = sphi 0, %s90
      %s112 = sphi 0, %s114
      %s115 = sphi 0, %s112
      %s116 = sphi 0, %s115
      %s132 = sphi 0, %s116
      %s138 = sphi 0, %s140
      %s141 = sphi 0, %s138
      %s142 = sphi 0, %s141
      %s158 = sphi 0, %s142
      %s162 = sphi 0, %s162
      %s164 = sphi 0, %s162
      %s165 = sphi 0, %s164
      %s179 = sphi 0, %s165
      %s183 = sphi 0, %s183
      %s185 = sphi 0, %s183
      %s186 = sphi 0, %s185
      %s200 = sphi 0, %s186
      %s204 = sphi 0, %s204
      %s206 = sphi 0, %s204
      %s207 = sphi 0, %s206
      %s221 = sphi 0, %s207
      %s225 = sphi 0, %s225
      %s227 = sphi 0, %s225
      %s228 = sphi 0, %s227
      %s242 = sphi 0, %s228
      %s246 = sphi 0, %s246
      %s248 = sphi 0, %s246
      %s249 = sphi 0, %s248
      %s263 = sphi 0, %s249
      %s267 = sphi 0, %s267
      %s269 = sphi 0, %s267
      %s270 = sphi 0, %s269
      %s284 = sphi 0, %s270
      %s290 = sphi 0, %s292
      %s293 = sphi 0, %s290
      %s294 = sphi 0, %s293
      %s310 = sphi 0, %s294
    $region4: #{tpu_custom_call.1} parent=1 // loop_header_branch
      %32 = sbr.rel (%p30) target = $region8
    $region5: #{tpu_custom_call.1} parent=1 // loop_body
      %s34 = ssub.s32 %s29, 1
      %s35 = ssub.s32 %s29, 2
      %s36 = sadd.s32 %s29, 1
      %s38 = sadd.s32 %s37, 1
      %p41 = scmp.eq.s32.totalorder %s29, 1
      %p42 = scmp.ne.s32.totalorder %s37, %s39
      %p43 = scmp.eq.s32.totalorder %s29, 0
      %p44 = por %p42, %p43
      %p45 = scmp.ne.s32.totalorder %s37, %s39
      %p46 = scmp.eq.s32.totalorder %s34, 1
      %p47 = por %p45, %p46
      %p48 = scmp.ne.s32.totalorder %s39, %s40
      %p49 = scmp.eq.s32.totalorder %s34, 0
      %p50 = por %p48, %p49
      %p51 = scmp.ne.s32.totalorder %s39, %s40
      %p52 = scmp.eq.s32.totalorder %s35, 1
      %p53 = por %p51, %p52
      %p55 = scmp.ne.s32.totalorder %s40, %s54
      %p56 = scmp.eq.s32.totalorder %s35, 0
      %p57 = por %p55, %p56
      %s58 = ssub.s32 %s29, %s36
      %p59 = scmp.eq.s32.totalorder %s58, 0
      %s61 = sadd.s32 %s60, 1
      %s62 = scalar_select %p59, %s60, %s61
      %p65 = pneg %p59
      %p66 = scmp.eq.s32.totalorder %s29, 1
      %p67 = por %p65, %p66
      %p68 = scmp.ne.s32.totalorder %s60, %s63
      %p69 = scmp.eq.s32.totalorder %s29, 0
      %p70 = por %p68, %p69
      %p71 = scmp.ne.s32.totalorder %s60, %s63
      %p72 = scmp.eq.s32.totalorder %s34, 1
      %p73 = por %p71, %p72
      %p74 = scmp.ne.s32.totalorder %s63, %s64
      %p75 = scmp.eq.s32.totalorder %s34, 0
      %p76 = por %p74, %p75
      %p77 = scmp.ne.s32.totalorder %s63, %s64
      %p78 = scmp.eq.s32.totalorder %s35, 1
      %p79 = por %p77, %p78
      %p81 = scmp.ne.s32.totalorder %s64, %s80
      %p82 = scmp.eq.s32.totalorder %s35, 0
      %p83 = por %p81, %p82
      %s84 = ssub.s32 %s29, %s36
      %p85 = scmp.eq.s32.totalorder %s84, 0
      %s87 = sadd.s32 %s86, 1
      %s88 = scalar_select %p85, %s86, %s87
      %p91 = pneg %p85
      %p92 = scmp.eq.s32.totalorder %s29, 1
      %p93 = por %p91, %p92
      %p94 = scmp.ne.s32.totalorder %s86, %s89
      %p95 = scmp.eq.s32.totalorder %s29, 0
      %p96 = por %p94, %p95
      %p97 = scmp.ne.s32.totalorder %s86, %s89
      %p98 = scmp.eq.s32.totalorder %s34, 1
      %p99 = por %p97, %p98
      %p100 = scmp.ne.s32.totalorder %s89, %s90
      %p101 = scmp.eq.s32.totalorder %s34, 0
      %p102 = por %p100, %p101
      %p103 = scmp.ne.s32.totalorder %s89, %s90
      %p104 = scmp.eq.s32.totalorder %s35, 1
      %p105 = por %p103, %p104
      %p107 = scmp.ne.s32.totalorder %s90, %s106
      %p108 = scmp.eq.s32.totalorder %s35, 0
      %p109 = por %p107, %p108
      %s110 = ssub.s32 %s29, %s36
      %p111 = scmp.eq.s32.totalorder %s110, 0
      %s113 = sadd.s32 %s112, 1
      %s114 = scalar_select %p111, %s112, %s113
      %p117 = pneg %p111
      %p118 = scmp.eq.s32.totalorder %s29, 1
      %p119 = por %p117, %p118
      %p120 = scmp.ne.s32.totalorder %s112, %s115
      %p121 = scmp.eq.s32.totalorder %s29, 0
      %p122 = por %p120, %p121
      %p123 = scmp.ne.s32.totalorder %s112, %s115
      %p124 = scmp.eq.s32.totalorder %s34, 1
      %p125 = por %p123, %p124
      %p126 = scmp.ne.s32.totalorder %s115, %s116
      %p127 = scmp.eq.s32.totalorder %s34, 0
      %p128 = por %p126, %p127
      %p129 = scmp.ne.s32.totalorder %s115, %s116
      %p130 = scmp.eq.s32.totalorder %s35, 1
      %p131 = por %p129, %p130
      %p133 = scmp.ne.s32.totalorder %s116, %s132
      %p134 = scmp.eq.s32.totalorder %s35, 0
      %p135 = por %p133, %p134
      %s136 = ssub.s32 %s29, %s36
      %p137 = scmp.eq.s32.totalorder %s136, 0
      %s139 = sadd.s32 %s138, 1
      %s140 = scalar_select %p137, %s138, %s139
      %p143 = pneg %p137
      %p144 = scmp.eq.s32.totalorder %s29, 1
      %p145 = por %p143, %p144
      %p146 = scmp.ne.s32.totalorder %s138, %s141
      %p147 = scmp.eq.s32.totalorder %s29, 0
      %p148 = por %p146, %p147
      %p149 = scmp.ne.s32.totalorder %s138, %s141
      %p150 = scmp.eq.s32.totalorder %s34, 1
      %p151 = por %p149, %p150
      %p152 = scmp.ne.s32.totalorder %s141, %s142
      %p153 = scmp.eq.s32.totalorder %s34, 0
      %p154 = por %p152, %p153
      %p155 = scmp.ne.s32.totalorder %s141, %s142
      %p156 = scmp.eq.s32.totalorder %s35, 1
      %p157 = por %p155, %p156
      %p159 = scmp.ne.s32.totalorder %s142, %s158
      %p160 = scmp.eq.s32.totalorder %s35, 0
      %p161 = por %p159, %p160
      %s163 = sadd.s32 %s162, 1
      %p166 = scmp.eq.s32.totalorder %s29, 1
      %p167 = scmp.ne.s32.totalorder %s162, %s164
      %p168 = scmp.eq.s32.totalorder %s29, 0
      %p169 = por %p167, %p168
      %p170 = scmp.ne.s32.totalorder %s162, %s164
      %p171 = scmp.eq.s32.totalorder %s34, 1
      %p172 = por %p170, %p171
      %p173 = scmp.ne.s32.totalorder %s164, %s165
      %p174 = scmp.eq.s32.totalorder %s34, 0
      %p175 = por %p173, %p174
      %p176 = scmp.ne.s32.totalorder %s164, %s165
      %p177 = scmp.eq.s32.totalorder %s35, 1
      %p178 = por %p176, %p177
      %p180 = scmp.ne.s32.totalorder %s165, %s179
      %p181 = scmp.eq.s32.totalorder %s35, 0
      %p182 = por %p180, %p181
      %s184 = sadd.s32 %s183, 1
      %p187 = scmp.eq.s32.totalorder %s29, 1
      %p188 = scmp.ne.s32.totalorder %s183, %s185
      %p189 = scmp.eq.s32.totalorder %s29, 0
      %p190 = por %p188, %p189
      %p191 = scmp.ne.s32.totalorder %s183, %s185
      %p192 = scmp.eq.s32.totalorder %s34, 1
      %p193 = por %p191, %p192
      %p194 = scmp.ne.s32.totalorder %s185, %s186
      %p195 = scmp.eq.s32.totalorder %s34, 0
      %p196 = por %p194, %p195
      %p197 = scmp.ne.s32.totalorder %s185, %s186
      %p198 = scmp.eq.s32.totalorder %s35, 1
      %p199 = por %p197, %p198
      %p201 = scmp.ne.s32.totalorder %s186, %s200
      %p202 = scmp.eq.s32.totalorder %s35, 0
      %p203 = por %p201, %p202
      %s205 = sadd.s32 %s204, 1
      %p208 = scmp.eq.s32.totalorder %s29, 1
      %p209 = scmp.ne.s32.totalorder %s204, %s206
      %p210 = scmp.eq.s32.totalorder %s29, 0
      %p211 = por %p209, %p210
      %p212 = scmp.ne.s32.totalorder %s204, %s206
      %p213 = scmp.eq.s32.totalorder %s34, 1
      %p214 = por %p212, %p213
      %p215 = scmp.ne.s32.totalorder %s206, %s207
      %p216 = scmp.eq.s32.totalorder %s34, 0
      %p217 = por %p215, %p216
      %p218 = scmp.ne.s32.totalorder %s206, %s207
      %p219 = scmp.eq.s32.totalorder %s35, 1
      %p220 = por %p218, %p219
      %p222 = scmp.ne.s32.totalorder %s207, %s221
      %p223 = scmp.eq.s32.totalorder %s35, 0
      %p224 = por %p222, %p223
      %s226 = sadd.s32 %s225, 1
      %p229 = scmp.eq.s32.totalorder %s29, 1
      %p230 = scmp.ne.s32.totalorder %s225, %s227
      %p231 = scmp.eq.s32.totalorder %s29, 0
      %p232 = por %p230, %p231
      %p233 = scmp.ne.s32.totalorder %s225, %s227
      %p234 = scmp.eq.s32.totalorder %s34, 1
      %p235 = por %p233, %p234
      %p236 = scmp.ne.s32.totalorder %s227, %s228
      %p237 = scmp.eq.s32.totalorder %s34, 0
      %p238 = por %p236, %p237
      %p239 = scmp.ne.s32.totalorder %s227, %s228
      %p240 = scmp.eq.s32.totalorder %s35, 1
      %p241 = por %p239, %p240
      %p243 = scmp.ne.s32.totalorder %s228, %s242
      %p244 = scmp.eq.s32.totalorder %s35, 0
      %p245 = por %p243, %p244
      %s247 = sadd.s32 %s246, 1
      %p250 = scmp.eq.s32.totalorder %s29, 1
      %p251 = scmp.ne.s32.totalorder %s246, %s248
      %p252 = scmp.eq.s32.totalorder %s29, 0
      %p253 = por %p251, %p252
      %p254 = scmp.ne.s32.totalorder %s246, %s248
      %p255 = scmp.eq.s32.totalorder %s34, 1
      %p256 = por %p254, %p255
      %p257 = scmp.ne.s32.totalorder %s248, %s249
      %p258 = scmp.eq.s32.totalorder %s34, 0
      %p259 = por %p257, %p258
      %p260 = scmp.ne.s32.totalorder %s248, %s249
      %p261 = scmp.eq.s32.totalorder %s35, 1
      %p262 = por %p260, %p261
      %p264 = scmp.ne.s32.totalorder %s249, %s263
      %p265 = scmp.eq.s32.totalorder %s35, 0
      %p266 = por %p264, %p265
      %s268 = sadd.s32 %s267, 1
      %p271 = scmp.eq.s32.totalorder %s29, 1
      %p272 = scmp.ne.s32.totalorder %s267, %s269
      %p273 = scmp.eq.s32.totalorder %s29, 0
      %p274 = por %p272, %p273
      %p275 = scmp.ne.s32.totalorder %s267, %s269
      %p276 = scmp.eq.s32.totalorder %s34, 1
      %p277 = por %p275, %p276
      %p278 = scmp.ne.s32.totalorder %s269, %s270
      %p279 = scmp.eq.s32.totalorder %s34, 0
      %p280 = por %p278, %p279
      %p281 = scmp.ne.s32.totalorder %s269, %s270
      %p282 = scmp.eq.s32.totalorder %s35, 1
      %p283 = por %p281, %p282
      %p285 = scmp.ne.s32.totalorder %s270, %s284
      %p286 = scmp.eq.s32.totalorder %s35, 0
      %p287 = por %p285, %p286
      %s288 = ssub.s32 %s29, %s36
      %p289 = scmp.eq.s32.totalorder %s288, 0
      %s291 = sadd.s32 %s290, 1
      %s292 = scalar_select %p289, %s290, %s291
      %p295 = pneg %p289
      %p296 = scmp.eq.s32.totalorder %s29, 1
      %p297 = por %p295, %p296
      %p298 = scmp.ne.s32.totalorder %s290, %s293
      %p299 = scmp.eq.s32.totalorder %s29, 0
      %p300 = por %p298, %p299
      %p301 = scmp.ne.s32.totalorder %s290, %s293
      %p302 = scmp.eq.s32.totalorder %s34, 1
      %p303 = por %p301, %p302
      %p304 = scmp.ne.s32.totalorder %s293, %s294
      %p305 = scmp.eq.s32.totalorder %s34, 0
      %p306 = por %p304, %p305
      %p307 = scmp.ne.s32.totalorder %s293, %s294
      %p308 = scmp.eq.s32.totalorder %s35, 1
      %p309 = por %p307, %p308
      %p311 = scmp.ne.s32.totalorder %s294, %s310
      %p312 = scmp.eq.s32.totalorder %s35, 0
      %p313 = por %p311, %p312
      %p314 = scmp.le.s32.totalorder 1, %s29
      %p315 = scmp.lt.s32.totalorder %s29, 3
      %p316 = pnand %p314, %p315
      %p317 = pneg %p316
      // Predicated region
      $region9: #{tpu_custom_call.1} parent=5 // pred_check
        _
      $region10: #{tpu_custom_call.1} parent=5 // pred_check_branch
        %319 = sbr.rel (%p316) target = $region12
      $region11: #{tpu_custom_call.1} parent=5 // pred_region
        %s320 = ssub.s32 %s29, 1
        // Predicated region
        $region13: #{tpu_custom_call.1} parent=11 // pred_check
          %p321 = pneg %p50
        $region14: #{tpu_custom_call.1} parent=11 // pred_check_branch
          %323 = sbr.rel (%p321) target = $region16
        $region15: #{tpu_custom_call.1} parent=11 // pred_region
          %325 = vsyncadd [#allocation4], 0
          %s326 = sshll.u32 %s0, 4
          %s327 = int_to_ptr.hbm [resolvable:$true] %s326
          %s328 = sshll.u32 [#allocation3], 4
          %s329 = int_to_ptr.vmem [resolvable:$true] %s328
          %334 = dma.hbm_to_vmem [thread:$0]  %s327, 256, %s329, [#allocation4], 64, 64, 4
        $region16: #{tpu_custom_call.1} parent=11 // pred_fallthru
          _
        // Predicated region
        $region17: #{tpu_custom_call.1} parent=11 // pred_check
          %p335 = pneg %p175
        $region18: #{tpu_custom_call.1} parent=11 // pred_check_branch
          %337 = sbr.rel (%p335) target = $region20
        $region19: #{tpu_custom_call.1} parent=11 // pred_region
          %339 = vsyncadd [#allocation13], 0
          %s340 = sshll.u32 %s5, 4
          %s341 = int_to_ptr.hbm [resolvable:$true] %s340
          %s342 = sshll.u32 [#allocation12], 4
          %s343 = int_to_ptr.vmem [resolvable:$true] %s342
          %348 = dma.hbm_to_vmem [thread:$0]  %s341, 512, %s343, [#allocation13], 128, 128, 8
        $region20: #{tpu_custom_call.1} parent=11 // pred_fallthru
          _
        // Predicated region
        $region21: #{tpu_custom_call.1} parent=11 // pred_check
          %p349 = pneg %p196
        $region22: #{tpu_custom_call.1} parent=11 // pred_check_branch
          %351 = sbr.rel (%p349) target = $region24
        $region23: #{tpu_custom_call.1} parent=11 // pred_region
          _
        $region24: #{tpu_custom_call.1} parent=11 // pred_fallthru
          _
        // Predicated region
        $region25: #{tpu_custom_call.1} parent=11 // pred_check
          %p352 = pneg %p217
        $region26: #{tpu_custom_call.1} parent=11 // pred_check_branch
          %354 = sbr.rel (%p352) target = $region28
        $region27: #{tpu_custom_call.1} parent=11 // pred_region
          %356 = vsyncadd [#allocation13], 0
          %s357 = sshll.u32 %s7, 4
          %s358 = int_to_ptr.hbm [resolvable:$true] %s357
          %s359 = sshll.u32 [#allocation14], 4
          %s360 = int_to_ptr.vmem [resolvable:$true] %s359
          %365 = dma.hbm_to_vmem [thread:$0]  %s358, 512, %s360, [#allocation13], 128, 128, 8
        $region28: #{tpu_custom_call.1} parent=11 // pred_fallthru
          _
        // Predicated region
        $region29: #{tpu_custom_call.1} parent=11 // pred_check
          %p366 = pneg %p238
        $region30: #{tpu_custom_call.1} parent=11 // pred_check_branch
          %368 = sbr.rel (%p366) target = $region32
        $region31: #{tpu_custom_call.1} parent=11 // pred_region
          _
        $region32: #{tpu_custom_call.1} parent=11 // pred_fallthru
          _
        // Predicated region
        $region33: #{tpu_custom_call.1} parent=11 // pred_check
          %p369 = pneg %p259
        $region34: #{tpu_custom_call.1} parent=11 // pred_check_branch
          %371 = sbr.rel (%p369) target = $region36
        $region35: #{tpu_custom_call.1} parent=11 // pred_region
          %373 = vsyncadd [#allocation16], 0
          %s374 = sshll.u32 %s9, 4
          %s375 = int_to_ptr.hbm [resolvable:$true] %s374
          %s376 = sshll.u32 [#allocation15], 4
          %s377 = int_to_ptr.vmem [resolvable:$true] %s376
          %382 = dma.hbm_to_vmem [thread:$0]  %s375, 512, %s377, [#allocation16], 128, 128, 8
        $region36: #{tpu_custom_call.1} parent=11 // pred_fallthru
          _
        // Predicated region
        $region37: #{tpu_custom_call.1} parent=11 // pred_check
          %p383 = pneg %p280
        $region38: #{tpu_custom_call.1} parent=11 // pred_check_branch
          %385 = sbr.rel (%p383) target = $region40
        $region39: #{tpu_custom_call.1} parent=11 // pred_region
          _
        $region40: #{tpu_custom_call.1} parent=11 // pred_fallthru
          _
      $region12: #{tpu_custom_call.1} parent=5 // pred_fallthru
        _
      %p386 = scmp.lt.s32.totalorder %s29, 2
      // Predicated region
      $region41: #{tpu_custom_call.1} parent=5 // pred_check
        %p387 = pneg %p386
      $region42: #{tpu_custom_call.1} parent=5 // pred_check_branch
        %389 = sbr.rel (%p387) target = $region44
      $region43: #{tpu_custom_call.1} parent=5 // pred_region
        // Predicated region
        $region45: #{tpu_custom_call.1} parent=43 // pred_check
          %p390 = pneg %p70
        $region46: #{tpu_custom_call.1} parent=43 // pred_check_branch
          %392 = sbr.rel (%p390) target = $region48
        $region47: #{tpu_custom_call.1} parent=43 // pred_region
          %s393 = sand.u32 %s29, 1
          %s394 = scalar_lea.sflag [#allocation7], %s393
          %s395 = sand.u32 %s60, 1
          %s396 = smul.addr %s395, 4
          %s397 = scalar_lea.vmem [#allocation6], %s396
          %399 = vsyncadd %s394, 0
          %s400 = smul.addr %s29, 4
          %s401 = scalar_lea.hbm %s1, %s400
          %s403 = sshll.u32 %s401, 4
          %s404 = int_to_ptr.hbm [resolvable:$true] %s403
          %s405 = sshll.u32 %s397, 4
          %s406 = int_to_ptr.vmem [resolvable:$true] %s405
          %408 = dma.hbm_to_vmem [thread:$0]  %s404, 64, %s406, %s394
        $region48: #{tpu_custom_call.1} parent=43 // pred_fallthru
          _
        // Predicated region
        $region49: #{tpu_custom_call.1} parent=43 // pred_check
          %p409 = pneg %p96
        $region50: #{tpu_custom_call.1} parent=43 // pred_check_branch
          %411 = sbr.rel (%p409) target = $region52
        $region51: #{tpu_custom_call.1} parent=43 // pred_region
          %s412 = sand.u32 %s29, 1
          %s413 = scalar_lea.sflag [#allocation7], %s412
          %s414 = sand.u32 %s86, 1
          %s415 = smul.addr %s414, 8
          %s416 = scalar_lea.vmem [#allocation8], %s415
          %418 = vsyncadd %s413, 0
          %s419 = smul.addr %s29, 8
          %s420 = scalar_lea.hbm %s2, %s419
          %s422 = sshll.u32 %s420, 4
          %s423 = int_to_ptr.hbm [resolvable:$true] %s422
          %s424 = sshll.u32 %s416, 4
          %s425 = int_to_ptr.vmem [resolvable:$true] %s424
          %427 = dma.hbm_to_vmem [thread:$0]  %s423, 128, %s425, %s413
        $region52: #{tpu_custom_call.1} parent=43 // pred_fallthru
          _
        // Predicated region
        $region53: #{tpu_custom_call.1} parent=43 // pred_check
          %p428 = pneg %p122
        $region54: #{tpu_custom_call.1} parent=43 // pred_check_branch
          %430 = sbr.rel (%p428) target = $region56
        $region55: #{tpu_custom_call.1} parent=43 // pred_region
          %s431 = sand.u32 %s29, 1
          %s432 = scalar_lea.sflag [#allocation10], %s431
          %s433 = sand.u32 %s112, 1
          %s434 = smul.addr %s433, 8
          %s435 = scalar_lea.vmem [#allocation9], %s434
          %437 = vsyncadd %s432, 0
          %s438 = smul.addr %s29, 8
          %s439 = scalar_lea.hbm %s3, %s438
          %s441 = sshll.u32 %s439, 4
          %s442 = int_to_ptr.hbm [resolvable:$true] %s441
          %s443 = sshll.u32 %s435, 4
          %s444 = int_to_ptr.vmem [resolvable:$true] %s443
          %446 = dma.hbm_to_vmem [thread:$0]  %s442, 128, %s444, %s432
        $region56: #{tpu_custom_call.1} parent=43 // pred_fallthru
          _
        // Predicated region
        $region57: #{tpu_custom_call.1} parent=43 // pred_check
          %p447 = pneg %p148
        $region58: #{tpu_custom_call.1} parent=43 // pred_check_branch
          %449 = sbr.rel (%p447) target = $region60
        $region59: #{tpu_custom_call.1} parent=43 // pred_region
          %s450 = sand.u32 %s29, 1
          %s451 = scalar_lea.sflag [#allocation10], %s450
          %s452 = sand.u32 %s138, 1
          %s453 = smul.addr %s452, 8
          %s454 = scalar_lea.vmem [#allocation11], %s453
          %456 = vsyncadd %s451, 0
          %s457 = smul.addr %s29, 8
          %s458 = scalar_lea.hbm %s4, %s457
          %s460 = sshll.u32 %s458, 4
          %s461 = int_to_ptr.hbm [resolvable:$true] %s460
          %s462 = sshll.u32 %s454, 4
          %s463 = int_to_ptr.vmem [resolvable:$true] %s462
          %465 = dma.hbm_to_vmem [thread:$0]  %s461, 128, %s463, %s451
        $region60: #{tpu_custom_call.1} parent=43 // pred_fallthru
          _
      $region44: #{tpu_custom_call.1} parent=5 // pred_fallthru
        _
      %p466 = scmp.le.s32.totalorder 1, %s29
      %p467 = scmp.lt.s32.totalorder %s29, 3
      %p468 = pnand %p466, %p467
      %p469 = pneg %p468
      // Predicated region
      $region61: #{tpu_custom_call.1} parent=5 // pred_check
        _
      $region62: #{tpu_custom_call.1} parent=5 // pred_check_branch
        %471 = sbr.rel (%p468) target = $region64
      $region63: #{tpu_custom_call.1} parent=5 // pred_region
        %s472 = ssub.s32 %s29, 1
        // Predicated region
        $region65: #{tpu_custom_call.1} parent=63 // pred_check
          %p473 = pneg %p50
        $region66: #{tpu_custom_call.1} parent=63 // pred_check_branch
          %475 = sbr.rel (%p473) target = $region68
        $region67: #{tpu_custom_call.1} parent=63 // pred_region
          %477 = dma.done [#allocation4], 256
        $region68: #{tpu_custom_call.1} parent=63 // pred_fallthru
          _
        %s478 = sand.u32 %s34, 1
        %s479 = scalar_lea.sflag [#allocation7], %s478
        %s480 = sand.u32 %s63, 1
        %s481 = smul.addr %s480, 4
        %s482 = scalar_lea.vmem [#allocation6], %s481
        // Predicated region
        $region69: #{tpu_custom_call.1} parent=63 // pred_check
          %p483 = pneg %p76
        $region70: #{tpu_custom_call.1} parent=63 // pred_check_branch
          %485 = sbr.rel (%p483) target = $region72
        $region71: #{tpu_custom_call.1} parent=63 // pred_region
          %487 = dma.done %s479, 64
        $region72: #{tpu_custom_call.1} parent=63 // pred_fallthru
          _
        %s488 = sand.u32 %s34, 1
        %s489 = scalar_lea.sflag [#allocation7], %s488
        %s490 = sand.u32 %s89, 1
        %s491 = smul.addr %s490, 8
        %s492 = scalar_lea.vmem [#allocation8], %s491
        // Predicated region
        $region73: #{tpu_custom_call.1} parent=63 // pred_check
          %p493 = pneg %p102
        $region74: #{tpu_custom_call.1} parent=63 // pred_check_branch
          %495 = sbr.rel (%p493) target = $region76
        $region75: #{tpu_custom_call.1} parent=63 // pred_region
          %497 = dma.done %s489, 128
        $region76: #{tpu_custom_call.1} parent=63 // pred_fallthru
          _
        %s498 = sand.u32 %s34, 1
        %s499 = scalar_lea.sflag [#allocation10], %s498
        %s500 = sand.u32 %s115, 1
        %s501 = smul.addr %s500, 8
        %s502 = scalar_lea.vmem [#allocation9], %s501
        // Predicated region
        $region77: #{tpu_custom_call.1} parent=63 // pred_check
          %p503 = pneg %p128
        $region78: #{tpu_custom_call.1} parent=63 // pred_check_branch
          %505 = sbr.rel (%p503) target = $region80
        $region79: #{tpu_custom_call.1} parent=63 // pred_region
          %507 = dma.done %s499, 128
        $region80: #{tpu_custom_call.1} parent=63 // pred_fallthru
          _
        %s508 = sand.u32 %s34, 1
        %s509 = scalar_lea.sflag [#allocation10], %s508
        %s510 = sand.u32 %s141, 1
        %s511 = smul.addr %s510, 8
        %s512 = scalar_lea.vmem [#allocation11], %s511
        // Predicated region
        $region81: #{tpu_custom_call.1} parent=63 // pred_check
          %p513 = pneg %p154
        $region82: #{tpu_custom_call.1} parent=63 // pred_check_branch
          %515 = sbr.rel (%p513) target = $region84
        $region83: #{tpu_custom_call.1} parent=63 // pred_region
          %517 = dma.done %s509, 128
        $region84: #{tpu_custom_call.1} parent=63 // pred_fallthru
          _
        // Predicated region
        $region85: #{tpu_custom_call.1} parent=63 // pred_check
          %p518 = pneg %p175
        $region86: #{tpu_custom_call.1} parent=63 // pred_check_branch
          %520 = sbr.rel (%p518) target = $region88
        $region87: #{tpu_custom_call.1} parent=63 // pred_region
          %522 = dma.done [#allocation13], 512
        $region88: #{tpu_custom_call.1} parent=63 // pred_fallthru
          _
        // Predicated region
        $region89: #{tpu_custom_call.1} parent=63 // pred_check
          %p523 = pneg %p217
        $region90: #{tpu_custom_call.1} parent=63 // pred_check_branch
          %525 = sbr.rel (%p523) target = $region92
        $region91: #{tpu_custom_call.1} parent=63 // pred_region
          %527 = dma.done [#allocation13], 512
        $region92: #{tpu_custom_call.1} parent=63 // pred_fallthru
          _
        // Predicated region
        $region93: #{tpu_custom_call.1} parent=63 // pred_check
          %p528 = pneg %p259
        $region94: #{tpu_custom_call.1} parent=63 // pred_check_branch
          %530 = sbr.rel (%p528) target = $region96
        $region95: #{tpu_custom_call.1} parent=63 // pred_region
          %532 = dma.done [#allocation16], 512
        $region96: #{tpu_custom_call.1} parent=63 // pred_fallthru
          _
        %p533 = pneg %p50
        %p534 = pneg %p47
        %s535 = sand.u32 %s34, 1
        %s536 = scalar_lea.sflag [#allocation7], %s535
        %s537 = sand.u32 %s63, 1
        %s538 = smul.addr %s537, 4
        %s539 = scalar_lea.vmem [#allocation6], %s538
        %p540 = pneg %p76
        %p541 = pneg %p73
        %s542 = sand.u32 %s34, 1
        %s543 = scalar_lea.sflag [#allocation7], %s542
        %s544 = sand.u32 %s89, 1
        %s545 = smul.addr %s544, 8
        %s546 = scalar_lea.vmem [#allocation8], %s545
        %p547 = pneg %p102
        %p548 = pneg %p99
        %s549 = sand.u32 %s34, 1
        %s550 = scalar_lea.sflag [#allocation10], %s549
        %s551 = sand.u32 %s115, 1
        %s552 = smul.addr %s551, 8
        %s553 = scalar_lea.vmem [#allocation9], %s552
        %p554 = pneg %p128
        %p555 = pneg %p125
        %s556 = sand.u32 %s34, 1
        %s557 = scalar_lea.sflag [#allocation10], %s556
        %s558 = sand.u32 %s141, 1
        %s559 = smul.addr %s558, 8
        %s560 = scalar_lea.vmem [#allocation11], %s559
        %p561 = pneg %p154
        %p562 = pneg %p151
        %p563 = pneg %p175
        %p564 = pneg %p172
        %p565 = pneg %p196
        %p566 = pneg %p193
        %p567 = pneg %p217
        %p568 = pneg %p214
        %p569 = pneg %p238
        %p570 = pneg %p235
        %p571 = pneg %p259
        %p572 = pneg %p256
        %p573 = pneg %p280
        %p574 = pneg %p277
        %p575 = pneg %p306
        %p576 = pneg %p303
        %s577 = sand.u32 %s293, 1
        %s578 = scalar_lea.sflag [#allocation5], %s577
        %s579 = sand.u32 %s293, 1
        %s580 = smul.addr %s579, 8
        %s581 = scalar_lea.vmem [#allocation17], %s580
        %v583 = vld [vmem:[#allocation12] sm:$0xff]
        %v584 = vld [vmem:[#allocation12 + $0x8] sm:$0xff]
        %v585 = vld [vmem:[#allocation12 + $0x10] sm:$0xff]
        %v586 = vld [vmem:[#allocation12 + $0x18] sm:$0xff]
        %v587 = vpack.c.bf16 %v584, %v583
        %v588 = vpack.c.bf16 %v586, %v585
        %v589 = vld [vmem:[#allocation14] sm:$0xff]
        %v590 = vld [vmem:[#allocation14 + $0x8] sm:$0xff]
        %v591 = vld [vmem:[#allocation14 + $0x10] sm:$0xff]
        %v592 = vld [vmem:[#allocation14 + $0x18] sm:$0xff]
        %v593 = vpack.c.bf16 %v590, %v589
        %v594 = vpack.c.bf16 %v592, %v591
        %v595 = vld [vmem:[%s6] sm:$0x1]
        %v596 = vld [vmem:[%s492] sm:$0xff]
        %v597 = vpack.c.bf16 %v596, %v596
        %v599 = vperm.slane %v595, 0
        %vm601 = vcmask 261120
        %v603 = vsel %vm601, %v597, 0
        %605 = vmatpush.bf16.msra.mxu0 0
        %606 = vmatpush.bf16.msra.mxu0 0
        %607 = vmatpush.bf16.msra.mxu0 0
        %608 = vmatpush.bf16.msra.mxu0 0
        %609 = vmatpush.bf16.msra.mxu0 0
        %610 = vmatpush.bf16.msra.mxu0 0
        %611 = vmatpush.bf16.msra.mxu0 %v588
        %612 = vmatpush.bf16.msra.mxu0 %v587
        %613 = vmatmul.bf16.gmra.mxu0 %v603
        %v614 = vpop.f32.mrf.mxu0
        %v615 = vadd.f32 %v599, %v614
        %v616 = vpop.f32.mrf.mxu0
        %617 = vdwg.mxu0
        %v618 = vld [vmem:[%s502] sm:$0xff]
        %v619 = vpack.c.bf16 %v618, %v618
        %v621 = vsel %vm601, %v619, 0
        %623 = vmatpush.bf16.msra.mxu0 0
        %624 = vmatpush.bf16.msra.mxu0 0
        %625 = vmatpush.bf16.msra.mxu0 0
        %626 = vmatpush.bf16.msra.mxu0 0
        %627 = vmatpush.bf16.msra.mxu0 0
        %628 = vmatpush.bf16.msra.mxu0 0
        %629 = vmatpush.bf16.msra.mxu0 %v588
        %630 = vmatpush.bf16.msra.mxu0 %v587
        %631 = vmatmul.bf16.gmra.mxu0 %v621
        %v632 = vpop.f32.mrf.mxu0
        %v633 = vadd.f32 %v599, %v632
        %v634 = vpop.f32.mrf.mxu0
        %635 = vdwg.mxu0
        %v636 = vld [vmem:[%s512] sm:$0xff]
        %v637 = vpack.c.bf16 %v636, %v636
        %v638 = vld [vmem:[%s8] sm:$0x1]
        %v640 = vperm.slane %v638, 0
        %v643 = vsel %vm601, %v637, 0
        %645 = vmatpush.bf16.msra.mxu0 0
        %646 = vmatpush.bf16.msra.mxu0 0
        %647 = vmatpush.bf16.msra.mxu0 0
        %648 = vmatpush.bf16.msra.mxu0 0
        %649 = vmatpush.bf16.msra.mxu0 0
        %650 = vmatpush.bf16.msra.mxu0 0
        %651 = vmatpush.bf16.msra.mxu0 %v594
        %652 = vmatpush.bf16.msra.mxu0 %v593
        %653 = vmatmul.bf16.gmra.mxu0 %v643
        %v654 = vpop.f32.mrf.mxu0
        %v655 = vadd.f32 %v640, %v654
        %v656 = vpop.f32.mrf.mxu0
        %657 = vdwg.mxu0
        %v658 = vlaneseq
        %v659 = vshrl.u32 %v658, 7
        %v660 = vlaneseq
        %v661 = vand.u32 %v660, 127
        %vm662 = vcmp.gt.s32.totalorder %v661, %v659
        %v663 = vld [vmem:[%s482] sm:$0xf]
        %v664 = vunpack.c.l.bf16 %v663
        %v665 = vpack.c.bf16 %v615, %v615
        %v666 = vpack.c.bf16 %v633, %v633
        %v667 = vpack.c.bf16 %v655, %v655
        %vm668 = vcmask 64512
        %v670 = vsel %vm668, %v665, 0
        %v673 = vsel %vm668, %v666, 0
        %675 = vmatpush.bf16.xpose.msra.mxu0 0
        %676 = vmatpush.bf16.xpose.msra.mxu0 0
        %677 = vmatpush.bf16.xpose.msra.mxu0 0
        %678 = vmatpush.bf16.xpose.msra.mxu0 0
        %679 = vmatpush.bf16.xpose.msra.mxu0 0
        %680 = vmatpush.bf16.xpose.msra.mxu0 0
        %681 = vmatpush.bf16.xpose.msra.mxu0 0
        %682 = vmatpush.bf16.xpose.msra.mxu0 %v673
        %683 = vmatmul.bf16.gmra.mxu0 %v670
        %v684 = vpop.f32.mrf.mxu0
        %v685 = vadd.f32 0.0, %v684
        %v686 = vpop.f32.mrf.mxu0
        %687 = vdwg.mxu0
        %v688 = vmul.f32 %v685, %v664
        %v689 = vld [vmem:[#allocation3] sm:$0xf]
        %v690 = vunpack.c.l.bf16 %v689
        %v691 = vmul.f32 %v688, %v690
        %v692 = vsel %vm662, -1e+32, %v691
        %v693 = vsel %vm668, %v692, -inf
        %694 = vmax.xlane.f32.xlu0 %v693
        %v695 = vpop.xlane.xlu0 %694
        %v696 = vsub.f32 %v692, %v695
        %v697 = vmul.f32 %v696, 1.442695
        %v698 = vpow.pop %v697
        %v699 = vsel %vm668, %v698, 0.0
        %700 = vadd.xlane.f32.xlu0 %v699
        %v701 = vpop.xlane.xlu0 %700
        %v702 = vrcp.pop %v701
        %v703 = vmul.f32 %v698, %v702
        %v704 = vpack.c.bf16 %v703, %v703
        %v706 = vsel %vm668, %v704, 0
        %vm708 = vcmask 1043456
        %v710 = vsel %vm708, %v667, 0
        %712 = vmatpush.bf16.msra.mxu0 0
        %713 = vmatpush.bf16.msra.mxu0 0
        %714 = vmatpush.bf16.msra.mxu0 0
        %715 = vmatpush.bf16.msra.mxu0 0
        %716 = vmatpush.bf16.msra.mxu0 0
        %717 = vmatpush.bf16.msra.mxu0 0
        %718 = vmatpush.bf16.msra.mxu0 0
        %719 = vmatpush.bf16.msra.mxu0 %v710
        %720 = vmatmul.bf16.gmra.mxu0 %v706
        %v721 = vpop.f32.mrf.mxu0
        %v722 = vadd.f32 0.0, %v721
        %v723 = vpop.f32.mrf.mxu0
        %724 = vdwg.mxu0
        %725 = vst.msk [vmem:[#allocation2] sm:$0xff] %vm668, %v722
        %727 = vrot.lane.b32.xlu0 %v665, 120
        %v728 = vpop.permute.xlu0 %727
        %730 = vrot.lane.b32.xlu0 %v666, 120
        %v731 = vpop.permute.xlu0 %730
        %v733 = vsel %vm668, %v728, 0
        %v736 = vsel %vm668, %v731, 0
        %738 = vmatpush.bf16.xpose.msra.mxu0 0
        %739 = vmatpush.bf16.xpose.msra.mxu0 0
        %740 = vmatpush.bf16.xpose.msra.mxu0 0
        %741 = vmatpush.bf16.xpose.msra.mxu0 0
        %742 = vmatpush.bf16.xpose.msra.mxu0 0
        %743 = vmatpush.bf16.xpose.msra.mxu0 0
        %744 = vmatpush.bf16.xpose.msra.mxu0 0
        %745 = vmatpush.bf16.xpose.msra.mxu0 %v736
        %746 = vmatmul.bf16.gmra.mxu0 %v733
        %v747 = vpop.f32.mrf.mxu0
        %v748 = vadd.f32 0.0, %v747
        %v749 = vpop.f32.mrf.mxu0
        %750 = vdwg.mxu0
        %v751 = vmul.f32 %v748, %v664
        %s752 = scalar_lea.vmem [#allocation3], 4
        %v753 = vld [vmem:[%s752] sm:$0xf]
        %v754 = vunpack.c.l.bf16 %v753
        %v755 = vmul.f32 %v751, %v754
        %v756 = vsel %vm662, -1e+32, %v755
        %v757 = vsel %vm668, %v756, -inf
        %758 = vmax.xlane.f32.xlu0 %v757
        %v759 = vpop.xlane.xlu0 %758
        %v760 = vsub.f32 %v756, %v759
        %v761 = vmul.f32 %v760, 1.442695
        %v762 = vpow.pop %v761
        %v763 = vsel %vm668, %v762, 0.0
        %764 = vadd.xlane.f32.xlu0 %v763
        %v765 = vpop.xlane.xlu0 %764
        %v766 = vrcp.pop %v765
        %v767 = vmul.f32 %v762, %v766
        %v768 = vpack.c.bf16 %v767, %v767
        %770 = vrot.lane.b32.xlu0 %v667, 120
        %v771 = vpop.permute.xlu0 %770
        %v773 = vsel %vm668, %v768, 0
        %v776 = vsel %vm708, %v771, 0
        %778 = vmatpush.bf16.msra.mxu0 0
        %779 = vmatpush.bf16.msra.mxu0 0
        %780 = vmatpush.bf16.msra.mxu0 0
        %781 = vmatpush.bf16.msra.mxu0 0
        %782 = vmatpush.bf16.msra.mxu0 0
        %783 = vmatpush.bf16.msra.mxu0 0
        %784 = vmatpush.bf16.msra.mxu0 0
        %785 = vmatpush.bf16.msra.mxu0 %v776
        %786 = vmatmul.bf16.gmra.mxu0 %v773
        %v787 = vpop.f32.mrf.mxu0
        %v788 = vadd.f32 0.0, %v787
        %v789 = vpop.f32.mrf.mxu0
        %790 = vdwg.mxu0
        %792 = vrot.lane.b32.xlu0 %v788, 8
        %v793 = vpop.permute.xlu0 %792
        %vm795 = vcmask 130112
        %796 = vst.msk [vmem:[#allocation2] sm:$0xff] %vm795, %v793
        %797 = vrot.lane.b32.xlu0 %v665, 112
        %v798 = vpop.permute.xlu0 %797
        %799 = vrot.lane.b32.xlu0 %v666, 112
        %v800 = vpop.permute.xlu0 %799
        %v802 = vsel %vm668, %v798, 0
        %v805 = vsel %vm668, %v800, 0
        %807 = vmatpush.bf16.xpose.msra.mxu0 0
        %808 = vmatpush.bf16.xpose.msra.mxu0 0
        %809 = vmatpush.bf16.xpose.msra.mxu0 0
        %810 = vmatpush.bf16.xpose.msra.mxu0 0
        %811 = vmatpush.bf16.xpose.msra.mxu0 0
        %812 = vmatpush.bf16.xpose.msra.mxu0 0
        %813 = vmatpush.bf16.xpose.msra.mxu0 0
        %814 = vmatpush.bf16.xpose.msra.mxu0 %v805
        %815 = vmatmul.bf16.gmra.mxu0 %v802
        %v816 = vpop.f32.mrf.mxu0
        %v817 = vadd.f32 0.0, %v816
        %v818 = vpop.f32.mrf.mxu0
        %819 = vdwg.mxu0
        %v820 = vmul.f32 %v817, %v664
        %s821 = scalar_lea.vmem [#allocation3], 8
        %v822 = vld [vmem:[%s821] sm:$0xf]
        %v823 = vunpack.c.l.bf16 %v822
        %v824 = vmul.f32 %v820, %v823
        %v825 = vsel %vm662, -1e+32, %v824
        %v826 = vsel %vm668, %v825, -inf
        %827 = vmax.xlane.f32.xlu0 %v826
        %v828 = vpop.xlane.xlu0 %827
        %v829 = vsub.f32 %v825, %v828
        %v830 = vmul.f32 %v829, 1.442695
        %v831 = vpow.pop %v830
        %v832 = vsel %vm668, %v831, 0.0
        %833 = vadd.xlane.f32.xlu0 %v832
        %v834 = vpop.xlane.xlu0 %833
        %v835 = vrcp.pop %v834
        %v836 = vmul.f32 %v831, %v835
        %v837 = vpack.c.bf16 %v836, %v836
        %838 = vrot.lane.b32.xlu0 %v667, 112
        %v839 = vpop.permute.xlu0 %838
        %v841 = vsel %vm668, %v837, 0
        %v844 = vsel %vm708, %v839, 0
        %846 = vmatpush.bf16.msra.mxu0 0
        %847 = vmatpush.bf16.msra.mxu0 0
        %848 = vmatpush.bf16.msra.mxu0 0
        %849 = vmatpush.bf16.msra.mxu0 0
        %850 = vmatpush.bf16.msra.mxu0 0
        %851 = vmatpush.bf16.msra.mxu0 0
        %852 = vmatpush.bf16.msra.mxu0 0
        %853 = vmatpush.bf16.msra.mxu0 %v844
        %854 = vmatmul.bf16.gmra.mxu0 %v841
        %v855 = vpop.f32.mrf.mxu0
        %v856 = vadd.f32 0.0, %v855
        %v857 = vpop.f32.mrf.mxu0
        %858 = vdwg.mxu0
        %860 = vrot.lane.b32.xlu0 %v856, 16
        %v861 = vpop.permute.xlu0 %860
        %vm863 = vcmask 195712
        %864 = vst.msk [vmem:[#allocation2] sm:$0xff] %vm863, %v861
        %865 = vrot.lane.b32.xlu0 %v665, 104
        %v866 = vpop.permute.xlu0 %865
        %867 = vrot.lane.b32.xlu0 %v666, 104
        %v868 = vpop.permute.xlu0 %867
        %v870 = vsel %vm668, %v866, 0
        %v873 = vsel %vm668, %v868, 0
        %875 = vmatpush.bf16.xpose.msra.mxu0 0
        %876 = vmatpush.bf16.xpose.msra.mxu0 0
        %877 = vmatpush.bf16.xpose.msra.mxu0 0
        %878 = vmatpush.bf16.xpose.msra.mxu0 0
        %879 = vmatpush.bf16.xpose.msra.mxu0 0
        %880 = vmatpush.bf16.xpose.msra.mxu0 0
        %881 = vmatpush.bf16.xpose.msra.mxu0 0
        %882 = vmatpush.bf16.xpose.msra.mxu0 %v873
        %883 = vmatmul.bf16.gmra.mxu0 %v870
        %v884 = vpop.f32.mrf.mxu0
        %v885 = vadd.f32 0.0, %v884
        %v886 = vpop.f32.mrf.mxu0
        %887 = vdwg.mxu0
        %v888 = vmul.f32 %v885, %v664
        %s889 = scalar_lea.vmem [#allocation3], 12
        %v890 = vld [vmem:[%s889] sm:$0xf]
        %v891 = vunpack.c.l.bf16 %v890
        %v892 = vmul.f32 %v888, %v891
        %v893 = vsel %vm662, -1e+32, %v892
        %v894 = vsel %vm668, %v893, -inf
        %895 = vmax.xlane.f32.xlu0 %v894
        %v896 = vpop.xlane.xlu0 %895
        %v897 = vsub.f32 %v893, %v896
        %v898 = vmul.f32 %v897, 1.442695
        %v899 = vpow.pop %v898
        %v900 = vsel %vm668, %v899, 0.0
        %901 = vadd.xlane.f32.xlu0 %v900
        %v902 = vpop.xlane.xlu0 %901
        %v903 = vrcp.pop %v902
        %v904 = vmul.f32 %v899, %v903
        %v905 = vpack.c.bf16 %v904, %v904
        %906 = vrot.lane.b32.xlu0 %v667, 104
        %v907 = vpop.permute.xlu0 %906
        %v909 = vsel %vm668, %v905, 0
        %v912 = vsel %vm708, %v907, 0
        %914 = vmatpush.bf16.msra.mxu0 0
        %915 = vmatpush.bf16.msra.mxu0 0
        %916 = vmatpush.bf16.msra.mxu0 0
        %917 = vmatpush.bf16.msra.mxu0 0
        %918 = vmatpush.bf16.msra.mxu0 0
        %919 = vmatpush.bf16.msra.mxu0 0
        %920 = vmatpush.bf16.msra.mxu0 0
        %921 = vmatpush.bf16.msra.mxu0 %v912
        %922 = vmatmul.bf16.gmra.mxu0 %v909
        %v923 = vpop.f32.mrf.mxu0
        %v924 = vadd.f32 0.0, %v923
        %v925 = vpop.f32.mrf.mxu0
        %926 = vdwg.mxu0
        %928 = vrot.lane.b32.xlu0 %v924, 24
        %v929 = vpop.permute.xlu0 %928
        %vm931 = vcmask 261312
        %932 = vst.msk [vmem:[#allocation2] sm:$0xff] %vm931, %v929
        %vm933 = vcmask 253952
        %934 = vst.msk [vmem:[#allocation2] sm:$0x1] %vm933, 0.0
        %v935 = vld [vmem:[#allocation2] sm:$0xff]
        %v936 = vpack.c.bf16 %v935, %v935
        %v937 = vld [vmem:[#allocation15] sm:$0xff]
        %v938 = vld [vmem:[#allocation15 + $0x8] sm:$0xff]
        %v939 = vld [vmem:[#allocation15 + $0x10] sm:$0xff]
        %v940 = vld [vmem:[#allocation15 + $0x18] sm:$0xff]
        %v941 = vpack.c.bf16 %v938, %v937
        %v942 = vpack.c.bf16 %v940, %v939
        %v943 = vld [vmem:[%s10] sm:$0x1]
        %v945 = vperm.slane %v943, 0
        %v948 = vsel %vm601, %v936, 0
        %950 = vmatpush.bf16.msra.mxu0 0
        %951 = vmatpush.bf16.msra.mxu0 0
        %952 = vmatpush.bf16.msra.mxu0 0
        %953 = vmatpush.bf16.msra.mxu0 0
        %954 = vmatpush.bf16.msra.mxu0 0
        %955 = vmatpush.bf16.msra.mxu0 0
        %956 = vmatpush.bf16.msra.mxu0 %v942
        %957 = vmatpush.bf16.msra.mxu0 %v941
        %958 = vmatmul.bf16.gmra.mxu0 %v948
        %v959 = vpop.f32.mrf.mxu0
        %v960 = vadd.f32 %v945, %v959
        %v961 = vpop.f32.mrf.mxu0
        %962 = vdwg.mxu0
        %963 = vst.msk [vmem:[%s581] sm:$0xff] %vm601, %v960
        %s964 = sand.u32 %s293, 1
        %s965 = scalar_lea.sflag [#allocation5], %s964
        %s966 = sand.u32 %s293, 1
        %s967 = smul.addr %s966, 8
        %s968 = scalar_lea.vmem [#allocation17], %s967
        // Predicated region
        $region97: #{tpu_custom_call.1} parent=63 // pred_check
          %p969 = pneg %p303
        $region98: #{tpu_custom_call.1} parent=63 // pred_check_branch
          %971 = sbr.rel (%p969) target = $region100
        $region99: #{tpu_custom_call.1} parent=63 // pred_region
          %973 = vsyncadd %s965, 0
          %s974 = smul.addr %s34, 8
          %s975 = scalar_lea.hbm %s11, %s974
          %s977 = sshll.u32 %s968, 4
          %s978 = int_to_ptr.vmem [resolvable:$true] %s977
          %s979 = sshll.u32 %s975, 4
          %s980 = int_to_ptr.hbm [resolvable:$true] %s979
          %982 = dma.vmem_to_hbm [thread:$0]  %s978, 128, %s980, %s965
        $region100: #{tpu_custom_call.1} parent=63 // pred_fallthru
          _
      $region64: #{tpu_custom_call.1} parent=5 // pred_fallthru
        _
      %p983 = scmp.le.s32.totalorder 2, %s29
      // Predicated region
      $region101: #{tpu_custom_call.1} parent=5 // pred_check
        %p984 = pneg %p983
      $region102: #{tpu_custom_call.1} parent=5 // pred_check_branch
        %986 = sbr.rel (%p984) target = $region104
      $region103: #{tpu_custom_call.1} parent=5 // pred_region
        %s987 = ssub.s32 %s29, 2
        // Predicated region
        $region105: #{tpu_custom_call.1} parent=103 // pred_check
          %p988 = pneg %p309
        $region106: #{tpu_custom_call.1} parent=103 // pred_check_branch
          %990 = sbr.rel (%p988) target = $region108
        $region107: #{tpu_custom_call.1} parent=103 // pred_region
          %s991 = sand.u32 %s294, 1
          %s992 = scalar_lea.sflag [#allocation5], %s991
          %s993 = sand.u32 %s294, 1
          %s994 = smul.addr %s993, 8
          %s995 = scalar_lea.vmem [#allocation17], %s994
          %997 = dma.done %s992, 128
        $region108: #{tpu_custom_call.1} parent=103 // pred_fallthru
          _
      $region104: #{tpu_custom_call.1} parent=5 // pred_fallthru
        _
    $region6: #{tpu_custom_call.1} parent=1 // loop_footer
      %s33 = sadd.s32 1, %s29
    $region7: #{tpu_custom_call.1} parent=1 // loop_footer_branch
      %28 = sbr.rel target = $region3
    $region8: #{tpu_custom_call.1} parent=1 // loop_exit
      _
    %998 = vsyncpa [#allocation4], 1
    %s999 = scalar_lea.sflag [#allocation4], 1
    %1000 = vsyncpa %s999, 1
    %1001 = vsyncpa [#allocation7], 1
    %s1002 = scalar_lea.sflag [#allocation7], 1
    %1003 = vsyncpa %s1002, 1
    %1004 = vsyncpa [#allocation10], 1
    %s1005 = scalar_lea.sflag [#allocation10], 1
    %1006 = vsyncpa %s1005, 1
    %1007 = vsyncpa [#allocation13], 1
    %1008 = vsyncpa [#allocation16], 1
    %1009 = vsyncpa [#allocation5], 1
    %s1010 = scalar_lea.sflag [#allocation5], 1
    %1011 = vsyncpa %s1010, 1

// kernel: tpu_custom_call.1
$region0: #{tpu_custom_call.1}
  #allocation0 [shape = 'u32[]', space=smem, size = 0x4, offset = 0x4, fixed_abs, tag = 'smem constant byte address 0x4 - core index']
  #allocation1 [shape = 'u32[72,128]{1,0:T(1,128)}', space=vmem, size = 0x9000, scoped, tag = 'internal scratch']
  #allocation2 [shape = 'f32[8,32]{1,0:T(8,128)}', space=vmem, size = 0x1000, scoped, tag = 'scratch operand']
  %s0 = inlined_call_operand.hbm [shape: bf16[4,8,8], index: 0, kind: input, shape index: {}]
  %s1 = inlined_call_operand.hbm [shape: bf16[2,8,8], index: 1, kind: input, shape index: {}]
  %s2 = inlined_call_operand.hbm [shape: f32[2,8,32], index: 2, kind: input, shape index: {}]
  %s3 = inlined_call_operand.hbm [shape: f32[2,8,32], index: 3, kind: input, shape index: {}]
  %s4 = inlined_call_operand.hbm [shape: f32[2,8,32], index: 4, kind: input, shape index: {}]
  %s5 = inlined_call_operand.hbm [shape: f32[32,32], index: 5, kind: input, shape index: {}]
  %s6 = inlined_call_operand.vmem [shape: f32[1,32], index: 6, kind: input, shape index: {}]
  %s7 = inlined_call_operand.hbm [shape: f32[32,32], index: 7, kind: input, shape index: {}]
  %s8 = inlined_call_operand.vmem [shape: f32[1,32], index: 8, kind: input, shape index: {}]
  %s9 = inlined_call_operand.hbm [shape: f32[32,32], index: 9, kind: input, shape index: {}]
  %s10 = inlined_call_operand.vmem [shape: f32[1,32], index: 10, kind: input, shape index: {}]
  %s11 = inlined_call_operand.hbm [shape: f32[2,8,32], index: 11, kind: output, shape index: {}]
  %s12 = sld [smem:[#allocation0]]
  $region109: #{tpu_custom_call.1} parent=0
    _
  %s14 = ssub.s32 1, %s12
  %s15 = scalar_select 0, %s14, %s12
  $region1: #{tpu_custom_call.1} parent=0
    #allocation3 [shape = 'u8[8192]{0}', space=vmem, size = 0x2000, scoped, tag = 'input window, operand 0, single buffered']
    #allocation4 [shape = 's32[2]{0}', space=sflag, size = 0x8, scoped, tag = 'scoped memory for tpu_custom_call.1']
    #allocation5 [shape = 's32[2]{0}', space=sflag, size = 0x8, scoped, tag = 'scoped memory for tpu_custom_call.1']
    #allocation6 [shape = 'u8[4096]{0}', space=vmem, size = 0x1000, scoped, tag = 'input window, operand 1']
    #allocation7 [shape = 's32[2]{0}', space=sflag, size = 0x8, scoped, tag = 'scoped memory for tpu_custom_call.1']
    #allocation8 [shape = 'u8[8192]{0}', space=vmem, size = 0x2000, scoped, tag = 'input window, operand 2']
    #allocation9 [shape = 'u8[8192]{0}', space=vmem, size = 0x2000, scoped, tag = 'input window, operand 3']
    #allocation10 [shape = 's32[2]{0}', space=sflag, size = 0x8, scoped, tag = 'scoped memory for tpu_custom_call.1']
    #allocation11 [shape = 'u8[8192]{0}', space=vmem, size = 0x2000, scoped, tag = 'input window, operand 4']
    #allocation12 [shape = 'u8[16384]{0}', space=vmem, size = 0x4000, scoped, tag = 'input window, operand 5, single buffered']
    #allocation13 [shape = 's32[1]{0}', space=sflag, size = 0x4, scoped, tag = 'scoped memory for tpu_custom_call.1']
    #allocation14 [shape = 'u8[16384]{0}', space=vmem, size = 0x4000, scoped, tag = 'input window, operand 7, single buffered']
    #allocation15 [shape = 'u8[16384]{0}', space=vmem, size = 0x4000, scoped, tag = 'input window, operand 9, single buffered']
    #allocation16 [shape = 's32[1]{0}', space=sflag, size = 0x4, scoped, tag = 'scoped memory for tpu_custom_call.1']
    #allocation17 [shape = 'u8[8192]{0}', space=vmem, size = 0x2000, scoped, tag = 'output window, operand 0']
    %16 = vsyncpa [#allocation4], 0
    %17 = vsyncpa [#allocation7], 0
    %s18 = scalar_lea.sflag [#allocation7], 1
    %19 = vsyncpa %s18, 0
    %20 = vsyncpa [#allocation10], 0
    %s21 = scalar_lea.sflag [#allocation10], 1
    %22 = vsyncpa %s21, 0
    %23 = vsyncpa [#allocation13], 0
    %24 = vsyncpa [#allocation16], 0
    %25 = vsyncpa [#allocation5], 0
    %s26 = scalar_lea.sflag [#allocation5], 1
    %27 = vsyncpa %s26, 0
    loop: start=0, step=1, limit=4
    $region2: #{tpu_custom_call.1} parent=1 // loop_pre_header
      _
    $region3: #{tpu_custom_call.1} parent=1 // loop_header
      %s29 = sphi 0, %s33
      %p30 = scmp.ge.s32.totalorder %s29, 4
      %s37 = sphi 0, %s37
      %s39 = sphi 0, %s37
      %s40 = sphi 0, %s39
      %s54 = sphi 0, %s40
      %s60 = sphi 0, %s62
      %s63 = sphi 0, %s60
      %s64 = sphi 0, %s63
      %s80 = sphi 0, %s64
      %s86 = sphi 0, %s88
      %s89 = sphi 0, %s86
      %s90 = sphi 0, %s89
      %s106 = sphi 0, %s90
      %s112 = sphi 0, %s114
      %s115 = sphi 0, %s112
      %s116 = sphi 0, %s115
      %s132 = sphi 0, %s116
      %s138 = sphi 0, %s140
      %s141 = sphi 0, %s138
      %s142 = sphi 0, %s141
      %s158 = sphi 0, %s142
      %s162 = sphi 0, %s162
      %s164 = sphi 0, %s162
      %s165 = sphi 0, %s164
      %s179 = sphi 0, %s165
      %s183 = sphi 0, %s183
      %s185 = sphi 0, %s183
      %s186 = sphi 0, %s185
      %s200 = sphi 0, %s186
      %s204 = sphi 0, %s204
      %s206 = sphi 0, %s204
      %s207 = sphi 0, %s206
      %s221 = sphi 0, %s207
      %s225 = sphi 0, %s225
      %s227 = sphi 0, %s225
      %s228 = sphi 0, %s227
      %s242 = sphi 0, %s228
      %s246 = sphi 0, %s246
      %s248 = sphi 0, %s246
      %s249 = sphi 0, %s248
      %s263 = sphi 0, %s249
      %s267 = sphi 0, %s267
      %s269 = sphi 0, %s267
      %s270 = sphi 0, %s269
      %s284 = sphi 0, %s270
      %s290 = sphi 0, %s292
      %s293 = sphi 0, %s290
      %s294 = sphi 0, %s293
      %s310 = sphi 0, %s294
    $region4: #{tpu_custom_call.1} parent=1 // loop_header_branch
      %32 = sbr.rel (%p30) target = $region8
    $region5: #{tpu_custom_call.1} parent=1 // loop_body
      %s34 = ssub.s32 %s29, 1
      %s35 = ssub.s32 %s29, 2
      %s36 = sadd.s32 %s29, 1
      %s38 = sadd.s32 %s37, 1
      %p41 = scmp.eq.s32.totalorder %s29, 1
      %p42 = scmp.ne.s32.totalorder %s37, %s39
      %p43 = scmp.eq.s32.totalorder %s29, 0
      %p44 = por %p42, %p43
      %p45 = scmp.ne.s32.totalorder %s37, %s39
      %p46 = scmp.eq.s32.totalorder %s34, 1
      %p47 = por %p45, %p46
      %p48 = scmp.ne.s32.totalorder %s39, %s40
      %p49 = scmp.eq.s32.totalorder %s34, 0
      %p50 = por %p48, %p49
      %p51 = scmp.ne.s32.totalorder %s39, %s40
      %p52 = scmp.eq.s32.totalorder %s35, 1
      %p53 = por %p51, %p52
      %p55 = scmp.ne.s32.totalorder %s40, %s54
      %p56 = scmp.eq.s32.totalorder %s35, 0
      %p57 = por %p55, %p56
      %s58 = ssub.s32 %s29, %s36
      %p59 = scmp.eq.s32.totalorder %s58, 0
      %s61 = sadd.s32 %s60, 1
      %s62 = scalar_select %p59, %s60, %s61
      %p65 = pneg %p59
      %p66 = scmp.eq.s32.totalorder %s29, 1
      %p67 = por %p65, %p66
      %p68 = scmp.ne.s32.totalorder %s60, %s63
      %p69 = scmp.eq.s32.totalorder %s29, 0
      %p70 = por %p68, %p69
      %p71 = scmp.ne.s32.totalorder %s60, %s63
      %p72 = scmp.eq.s32.totalorder %s34, 1
      %p73 = por %p71, %p72
      %p74 = scmp.ne.s32.totalorder %s63, %s64
      %p75 = scmp.eq.s32.totalorder %s34, 0
      %p76 = por %p74, %p75
      %p77 = scmp.ne.s32.totalorder %s63, %s64
      %p78 = scmp.eq.s32.totalorder %s35, 1
      %p79 = por %p77, %p78
      %p81 = scmp.ne.s32.totalorder %s64, %s80
      %p82 = scmp.eq.s32.totalorder %s35, 0
      %p83 = por %p81, %p82
      %s84 = ssub.s32 %s29, %s36
      %p85 = scmp.eq.s32.totalorder %s84, 0
      %s87 = sadd.s32 %s86, 1
      %s88 = scalar_select %p85, %s86, %s87
      %p91 = pneg %p85
      %p92 = scmp.eq.s32.totalorder %s29, 1
      %p93 = por %p91, %p92
      %p94 = scmp.ne.s32.totalorder %s86, %s89
      %p95 = scmp.eq.s32.totalorder %s29, 0
      %p96 = por %p94, %p95
      %p97 = scmp.ne.s32.totalorder %s86, %s89
      %p98 = scmp.eq.s32.totalorder %s34, 1
      %p99 = por %p97, %p98
      %p100 = scmp.ne.s32.totalorder %s89, %s90
      %p101 = scmp.eq.s32.totalorder %s34, 0
      %p102 = por %p100, %p101
      %p103 = scmp.ne.s32.totalorder %s89, %s90
      %p104 = scmp.eq.s32.totalorder %s35, 1
      %p105 = por %p103, %p104
      %p107 = scmp.ne.s32.totalorder %s90, %s106
      %p108 = scmp.eq.s32.totalorder %s35, 0
      %p109 = por %p107, %p108
      %s110 = ssub.s32 %s29, %s36
      %p111 = scmp.eq.s32.totalorder %s110, 0
      %s113 = sadd.s32 %s112, 1
      %s114 = scalar_select %p111, %s112, %s113
      %p117 = pneg %p111
      %p118 = scmp.eq.s32.totalorder %s29, 1
      %p119 = por %p117, %p118
      %p120 = scmp.ne.s32.totalorder %s112, %s115
      %p121 = scmp.eq.s32.totalorder %s29, 0
      %p122 = por %p120, %p121
      %p123 = scmp.ne.s32.totalorder %s112, %s115
      %p124 = scmp.eq.s32.totalorder %s34, 1
      %p125 = por %p123, %p124
      %p126 = scmp.ne.s32.totalorder %s115, %s116
      %p127 = scmp.eq.s32.totalorder %s34, 0
      %p128 = por %p126, %p127
      %p129 = scmp.ne.s32.totalorder %s115, %s116
      %p130 = scmp.eq.s32.totalorder %s35, 1
      %p131 = por %p129, %p130
      %p133 = scmp.ne.s32.totalorder %s116, %s132
      %p134 = scmp.eq.s32.totalorder %s35, 0
      %p135 = por %p133, %p134
      %s136 = ssub.s32 %s29, %s36
      %p137 = scmp.eq.s32.totalorder %s136, 0
      %s139 = sadd.s32 %s138, 1
      %s140 = scalar_select %p137, %s138, %s139
      %p143 = pneg %p137
      %p144 = scmp.eq.s32.totalorder %s29, 1
      %p145 = por %p143, %p144
      %p146 = scmp.ne.s32.totalorder %s138, %s141
      %p147 = scmp.eq.s32.totalorder %s29, 0
      %p148 = por %p146, %p147
      %p149 = scmp.ne.s32.totalorder %s138, %s141
      %p150 = scmp.eq.s32.totalorder %s34, 1
      %p151 = por %p149, %p150
      %p152 = scmp.ne.s32.totalorder %s141, %s142
      %p153 = scmp.eq.s32.totalorder %s34, 0
      %p154 = por %p152, %p153
      %p155 = scmp.ne.s32.totalorder %s141, %s142
      %p156 = scmp.eq.s32.totalorder %s35, 1
      %p157 = por %p155, %p156
      %p159 = scmp.ne.s32.totalorder %s142, %s158
      %p160 = scmp.eq.s32.totalorder %s35, 0
      %p161 = por %p159, %p160
      %s163 = sadd.s32 %s162, 1
      %p166 = scmp.eq.s32.totalorder %s29, 1
      %p167 = scmp.ne.s32.totalorder %s162, %s164
      %p168 = scmp.eq.s32.totalorder %s29, 0
      %p169 = por %p167, %p168
      %p170 = scmp.ne.s32.totalorder %s162, %s164
      %p171 = scmp.eq.s32.totalorder %s34, 1
      %p172 = por %p170, %p171
      %p173 = scmp.ne.s32.totalorder %s164, %s165
      %p174 = scmp.eq.s32.totalorder %s34, 0
      %p175 = por %p173, %p174
      %p176 = scmp.ne.s32.totalorder %s164, %s165
      %p177 = scmp.eq.s32.totalorder %s35, 1
      %p178 = por %p176, %p177
      %p180 = scmp.ne.s32.totalorder %s165, %s179
      %p181 = scmp.eq.s32.totalorder %s35, 0
      %p182 = por %p180, %p181
      %s184 = sadd.s32 %s183, 1
      %p187 = scmp.eq.s32.totalorder %s29, 1
      %p188 = scmp.ne.s32.totalorder %s183, %s185
      %p189 = scmp.eq.s32.totalorder %s29, 0
      %p190 = por %p188, %p189
      %p191 = scmp.ne.s32.totalorder %s183, %s185
      %p192 = scmp.eq.s32.totalorder %s34, 1
      %p193 = por %p191, %p192
      %p194 = scmp.ne.s32.totalorder %s185, %s186
      %p195 = scmp.eq.s32.totalorder %s34, 0
      %p196 = por %p194, %p195
      %p197 = scmp.ne.s32.totalorder %s185, %s186
      %p198 = scmp.eq.s32.totalorder %s35, 1
      %p199 = por %p197, %p198
      %p201 = scmp.ne.s32.totalorder %s186, %s200
      %p202 = scmp.eq.s32.totalorder %s35, 0
      %p203 = por %p201, %p202
      %s205 = sadd.s32 %s204, 1
      %p208 = scmp.eq.s32.totalorder %s29, 1
      %p209 = scmp.ne.s32.totalorder %s204, %s206
      %p210 = scmp.eq.s32.totalorder %s29, 0
      %p211 = por %p209, %p210
      %p212 = scmp.ne.s32.totalorder %s204, %s206
      %p213 = scmp.eq.s32.totalorder %s34, 1
      %p214 = por %p212, %p213
      %p215 = scmp.ne.s32.totalorder %s206, %s207
      %p216 = scmp.eq.s32.totalorder %s34, 0
      %p217 = por %p215, %p216
      %p218 = scmp.ne.s32.totalorder %s206, %s207
      %p219 = scmp.eq.s32.totalorder %s35, 1
      %p220 = por %p218, %p219
      %p222 = scmp.ne.s32.totalorder %s207, %s221
      %p223 = scmp.eq.s32.totalorder %s35, 0
      %p224 = por %p222, %p223
      %s226 = sadd.s32 %s225, 1
      %p229 = scmp.eq.s32.totalorder %s29, 1
      %p230 = scmp.ne.s32.totalorder %s225, %s227
      %p231 = scmp.eq.s32.totalorder %s29, 0
      %p232 = por %p230, %p231
      %p233 = scmp.ne.s32.totalorder %s225, %s227
      %p234 = scmp.eq.s32.totalorder %s34, 1
      %p235 = por %p233, %p234
      %p236 = scmp.ne.s32.totalorder %s227, %s228
      %p237 = scmp.eq.s32.totalorder %s34, 0
      %p238 = por %p236, %p237
      %p239 = scmp.ne.s32.totalorder %s227, %s228
      %p240 = scmp.eq.s32.totalorder %s35, 1
      %p241 = por %p239, %p240
      %p243 = scmp.ne.s32.totalorder %s228, %s242
      %p244 = scmp.eq.s32.totalorder %s35, 0
      %p245 = por %p243, %p244
      %s247 = sadd.s32 %s246, 1
      %p250 = scmp.eq.s32.totalorder %s29, 1
      %p251 = scmp.ne.s32.totalorder %s246, %s248
      %p252 = scmp.eq.s32.totalorder %s29, 0
      %p253 = por %p251, %p252
      %p254 = scmp.ne.s32.totalorder %s246, %s248
      %p255 = scmp.eq.s32.totalorder %s34, 1
      %p256 = por %p254, %p255
      %p257 = scmp.ne.s32.totalorder %s248, %s249
      %p258 = scmp.eq.s32.totalorder %s34, 0
      %p259 = por %p257, %p258
      %p260 = scmp.ne.s32.totalorder %s248, %s249
      %p261 = scmp.eq.s32.totalorder %s35, 1
      %p262 = por %p260, %p261
      %p264 = scmp.ne.s32.totalorder %s249, %s263
      %p265 = scmp.eq.s32.totalorder %s35, 0
      %p266 = por %p264, %p265
      %s268 = sadd.s32 %s267, 1
      %p271 = scmp.eq.s32.totalorder %s29, 1
      %p272 = scmp.ne.s32.totalorder %s267, %s269
      %p273 = scmp.eq.s32.totalorder %s29, 0
      %p274 = por %p272, %p273
      %p275 = scmp.ne.s32.totalorder %s267, %s269
      %p276 = scmp.eq.s32.totalorder %s34, 1
      %p277 = por %p275, %p276
      %p278 = scmp.ne.s32.totalorder %s269, %s270
      %p279 = scmp.eq.s32.totalorder %s34, 0
      %p280 = por %p278, %p279
      %p281 = scmp.ne.s32.totalorder %s269, %s270
      %p282 = scmp.eq.s32.totalorder %s35, 1
      %p283 = por %p281, %p282
      %p285 = scmp.ne.s32.totalorder %s270, %s284
      %p286 = scmp.eq.s32.totalorder %s35, 0
      %p287 = por %p285, %p286
      %s288 = ssub.s32 %s29, %s36
      %p289 = scmp.eq.s32.totalorder %s288, 0
      %s291 = sadd.s32 %s290, 1
      %s292 = scalar_select %p289, %s290, %s291
      %p295 = pneg %p289
      %p296 = scmp.eq.s32.totalorder %s29, 1
      %p297 = por %p295, %p296
      %p298 = scmp.ne.s32.totalorder %s290, %s293
      %p299 = scmp.eq.s32.totalorder %s29, 0
      %p300 = por %p298, %p299
      %p301 = scmp.ne.s32.totalorder %s290, %s293
      %p302 = scmp.eq.s32.totalorder %s34, 1
      %p303 = por %p301, %p302
      %p304 = scmp.ne.s32.totalorder %s293, %s294
      %p305 = scmp.eq.s32.totalorder %s34, 0
      %p306 = por %p304, %p305
      %p307 = scmp.ne.s32.totalorder %s293, %s294
      %p308 = scmp.eq.s32.totalorder %s35, 1
      %p309 = por %p307, %p308
      %p311 = scmp.ne.s32.totalorder %s294, %s310
      %p312 = scmp.eq.s32.totalorder %s35, 0
      %p313 = por %p311, %p312
      %p314 = scmp.le.s32.totalorder 1, %s29
      %p315 = scmp.lt.s32.totalorder %s29, 3
      %p316 = pnand %p314, %p315
      %p317 = pneg %p316
      // Predicated region
      $region9: #{tpu_custom_call.1} parent=5 // pred_check
        _
      $region10: #{tpu_custom_call.1} parent=5 // pred_check_branch
        %319 = sbr.rel (%p316) target = $region12
      $region11: #{tpu_custom_call.1} parent=5 // pred_region
        %s320 = ssub.s32 %s29, 1
        // Predicated region
        $region13: #{tpu_custom_call.1} parent=11 // pred_check
          %p321 = pneg %p50
        $region14: #{tpu_custom_call.1} parent=11 // pred_check_branch
          %323 = sbr.rel (%p321) target = $region16
        $region15: #{tpu_custom_call.1} parent=11 // pred_region
          %325 = vsyncadd [#allocation4], 0
          %s326 = sshll.u32 %s0, 4
          %s327 = int_to_ptr.hbm [resolvable:$true] %s326
          %s328 = sshll.u32 [#allocation3], 4
          %s329 = int_to_ptr.vmem [resolvable:$true] %s328
          %334 = dma.hbm_to_vmem [thread:$0]  %s327, 256, %s329, [#allocation4], 64, 64, 4
        $region16: #{tpu_custom_call.1} parent=11 // pred_fallthru
          _
        // Predicated region
        $region17: #{tpu_custom_call.1} parent=11 // pred_check
          %p335 = pneg %p175
        $region18: #{tpu_custom_call.1} parent=11 // pred_check_branch
          %337 = sbr.rel (%p335) target = $region20
        $region19: #{tpu_custom_call.1} parent=11 // pred_region
          %339 = vsyncadd [#allocation13], 0
          %s340 = sshll.u32 %s5, 4
          %s341 = int_to_ptr.hbm [resolvable:$true] %s340
          %s342 = sshll.u32 [#allocation12], 4
          %s343 = int_to_ptr.vmem [resolvable:$true] %s342
          %348 = dma.hbm_to_vmem [thread:$0]  %s341, 512, %s343, [#allocation13], 128, 128, 8
        $region20: #{tpu_custom_call.1} parent=11 // pred_fallthru
          _
        // Predicated region
        $region21: #{tpu_custom_call.1} parent=11 // pred_check
          %p349 = pneg %p196
        $region22: #{tpu_custom_call.1} parent=11 // pred_check_branch
          %351 = sbr.rel (%p349) target = $region24
        $region23: #{tpu_custom_call.1} parent=11 // pred_region
          _
        $region24: #{tpu_custom_call.1} parent=11 // pred_fallthru
          _
        // Predicated region
        $region25: #{tpu_custom_call.1} parent=11 // pred_check
          %p352 = pneg %p217
        $region26: #{tpu_custom_call.1} parent=11 // pred_check_branch
          %354 = sbr.rel (%p352) target = $region28
        $region27: #{tpu_custom_call.1} parent=11 // pred_region
          %356 = vsyncadd [#allocation13], 0
          %s357 = sshll.u32 %s7, 4
          %s358 = int_to_ptr.hbm [resolvable:$true] %s357
          %s359 = sshll.u32 [#allocation14], 4
          %s360 = int_to_ptr.vmem [resolvable:$true] %s359
          %365 = dma.hbm_to_vmem [thread:$0]  %s358, 512, %s360, [#allocation13], 128, 128, 8
        $region28: #{tpu_custom_call.1} parent=11 // pred_fallthru
          _
        // Predicated region
        $region29: #{tpu_custom_call.1} parent=11 // pred_check
          %p366 = pneg %p238
        $region30: #{tpu_custom_call.1} parent=11 // pred_check_branch
          %368 = sbr.rel (%p366) target = $region32
        $region31: #{tpu_custom_call.1} parent=11 // pred_region
          _
        $region32: #{tpu_custom_call.1} parent=11 // pred_fallthru
          _
        // Predicated region
        $region33: #{tpu_custom_call.1} parent=11 // pred_check
          %p369 = pneg %p259
        $region34: #{tpu_custom_call.1} parent=11 // pred_check_branch
          %371 = sbr.rel (%p369) target = $region36
        $region35: #{tpu_custom_call.1} parent=11 // pred_region
          %373 = vsyncadd [#allocation16], 0
          %s374 = sshll.u32 %s9, 4
          %s375 = int_to_ptr.hbm [resolvable:$true] %s374
          %s376 = sshll.u32 [#allocation15], 4
          %s377 = int_to_ptr.vmem [resolvable:$true] %s376
          %382 = dma.hbm_to_vmem [thread:$0]  %s375, 512, %s377, [#allocation16], 128, 128, 8
        $region36: #{tpu_custom_call.1} parent=11 // pred_fallthru
          _
        // Predicated region
        $region37: #{tpu_custom_call.1} parent=11 // pred_check
          %p383 = pneg %p280
        $region38: #{tpu_custom_call.1} parent=11 // pred_check_branch
          %385 = sbr.rel (%p383) target = $region40
        $region39: #{tpu_custom_call.1} parent=11 // pred_region
          _
        $region40: #{tpu_custom_call.1} parent=11 // pred_fallthru
          _
      $region12: #{tpu_custom_call.1} parent=5 // pred_fallthru
        _
      %p386 = scmp.lt.s32.totalorder %s29, 2
      // Predicated region
      $region41: #{tpu_custom_call.1} parent=5 // pred_check
        %p387 = pneg %p386
      $region42: #{tpu_custom_call.1} parent=5 // pred_check_branch
        %389 = sbr.rel (%p387) target = $region44
      $region43: #{tpu_custom_call.1} parent=5 // pred_region
        // Predicated region
        $region45: #{tpu_custom_call.1} parent=43 // pred_check
          %p390 = pneg %p70
        $region46: #{tpu_custom_call.1} parent=43 // pred_check_branch
          %392 = sbr.rel (%p390) target = $region48
        $region47: #{tpu_custom_call.1} parent=43 // pred_region
          %s393 = sand.u32 %s29, 1
          %s394 = scalar_lea.sflag [#allocation7], %s393
          %s395 = sand.u32 %s60, 1
          %s396 = smul.addr %s395, 4
          %s397 = scalar_lea.vmem [#allocation6], %s396
          %399 = vsyncadd %s394, 0
          %s400 = smul.addr %s29, 4
          %s401 = scalar_lea.hbm %s1, %s400
          %s403 = sshll.u32 %s401, 4
          %s404 = int_to_ptr.hbm [resolvable:$true] %s403
          %s405 = sshll.u32 %s397, 4
          %s406 = int_to_ptr.vmem [resolvable:$true] %s405
          %408 = dma.hbm_to_vmem [thread:$0]  %s404, 64, %s406, %s394
        $region48: #{tpu_custom_call.1} parent=43 // pred_fallthru
          _
        // Predicated region
        $region49: #{tpu_custom_call.1} parent=43 // pred_check
          %p409 = pneg %p96
        $region50: #{tpu_custom_call.1} parent=43 // pred_check_branch
          %411 = sbr.rel (%p409) target = $region52
        $region51: #{tpu_custom_call.1} parent=43 // pred_region
          %s412 = sand.u32 %s29, 1
          %s413 = scalar_lea.sflag [#allocation7], %s412
          %s414 = sand.u32 %s86, 1
          %s415 = smul.addr %s414, 8
          %s416 = scalar_lea.vmem [#allocation8], %s415
          %418 = vsyncadd %s413, 0
          %s419 = smul.addr %s29, 8
          %s420 = scalar_lea.hbm %s2, %s419
          %s422 = sshll.u32 %s420, 4
          %s423 = int_to_ptr.hbm [resolvable:$true] %s422
          %s424 = sshll.u32 %s416, 4
          %s425 = int_to_ptr.vmem [resolvable:$true] %s424
          %427 = dma.hbm_to_vmem [thread:$0]  %s423, 128, %s425, %s413
        $region52: #{tpu_custom_call.1} parent=43 // pred_fallthru
          _
        // Predicated region
        $region53: #{tpu_custom_call.1} parent=43 // pred_check
          %p428 = pneg %p122
        $region54: #{tpu_custom_call.1} parent=43 // pred_check_branch
          %430 = sbr.rel (%p428) target = $region56
        $region55: #{tpu_custom_call.1} parent=43 // pred_region
          %s431 = sand.u32 %s29, 1
          %s432 = scalar_lea.sflag [#allocation10], %s431
          %s433 = sand.u32 %s112, 1
          %s434 = smul.addr %s433, 8
          %s435 = scalar_lea.vmem [#allocation9], %s434
          %437 = vsyncadd %s432, 0
          %s438 = smul.addr %s29, 8
          %s439 = scalar_lea.hbm %s3, %s438
          %s441 = sshll.u32 %s439, 4
          %s442 = int_to_ptr.hbm [resolvable:$true] %s441
          %s443 = sshll.u32 %s435, 4
          %s444 = int_to_ptr.vmem [resolvable:$true] %s443
          %446 = dma.hbm_to_vmem [thread:$0]  %s442, 128, %s444, %s432
        $region56: #{tpu_custom_call.1} parent=43 // pred_fallthru
          _
        // Predicated region
        $region57: #{tpu_custom_call.1} parent=43 // pred_check
          %p447 = pneg %p148
        $region58: #{tpu_custom_call.1} parent=43 // pred_check_branch
          %449 = sbr.rel (%p447) target = $region60
        $region59: #{tpu_custom_call.1} parent=43 // pred_region
          %s450 = sand.u32 %s29, 1
          %s451 = scalar_lea.sflag [#allocation10], %s450
          %s452 = sand.u32 %s138, 1
          %s453 = smul.addr %s452, 8
          %s454 = scalar_lea.vmem [#allocation11], %s453
          %456 = vsyncadd %s451, 0
          %s457 = smul.addr %s29, 8
          %s458 = scalar_lea.hbm %s4, %s457
          %s460 = sshll.u32 %s458, 4
          %s461 = int_to_ptr.hbm [resolvable:$true] %s460
          %s462 = sshll.u32 %s454, 4
          %s463 = int_to_ptr.vmem [resolvable:$true] %s462
          %465 = dma.hbm_to_vmem [thread:$0]  %s461, 128, %s463, %s451
        $region60: #{tpu_custom_call.1} parent=43 // pred_fallthru
          _
      $region44: #{tpu_custom_call.1} parent=5 // pred_fallthru
        _
      %p466 = scmp.le.s32.totalorder 1, %s29
      %p467 = scmp.lt.s32.totalorder %s29, 3
      %p468 = pnand %p466, %p467
      %p469 = pneg %p468
      // Predicated region
      $region61: #{tpu_custom_call.1} parent=5 // pred_check
        _
      $region62: #{tpu_custom_call.1} parent=5 // pred_check_branch
        %471 = sbr.rel (%p468) target = $region64
      $region63: #{tpu_custom_call.1} parent=5 // pred_region
        %s472 = ssub.s32 %s29, 1
        // Predicated region
        $region65: #{tpu_custom_call.1} parent=63 // pred_check
          %p473 = pneg %p50
        $region66: #{tpu_custom_call.1} parent=63 // pred_check_branch
          %475 = sbr.rel (%p473) target = $region68
        $region67: #{tpu_custom_call.1} parent=63 // pred_region
          %477 = dma.done [#allocation4], 256
        $region68: #{tpu_custom_call.1} parent=63 // pred_fallthru
          _
        %s478 = sand.u32 %s34, 1
        %s479 = scalar_lea.sflag [#allocation7], %s478
        %s480 = sand.u32 %s63, 1
        %s481 = smul.addr %s480, 4
        %s482 = scalar_lea.vmem [#allocation6], %s481
        // Predicated region
        $region69: #{tpu_custom_call.1} parent=63 // pred_check
          %p483 = pneg %p76
        $region70: #{tpu_custom_call.1} parent=63 // pred_check_branch
          %485 = sbr.rel (%p483) target = $region72
        $region71: #{tpu_custom_call.1} parent=63 // pred_region
          %487 = dma.done %s479, 64
        $region72: #{tpu_custom_call.1} parent=63 // pred_fallthru
          _
        %s488 = sand.u32 %s34, 1
        %s489 = scalar_lea.sflag [#allocation7], %s488
        %s490 = sand.u32 %s89, 1
        %s491 = smul.addr %s490, 8
        %s492 = scalar_lea.vmem [#allocation8], %s491
        // Predicated region
        $region73: #{tpu_custom_call.1} parent=63 // pred_check
          %p493 = pneg %p102
        $region74: #{tpu_custom_call.1} parent=63 // pred_check_branch
          %495 = sbr.rel (%p493) target = $region76
        $region75: #{tpu_custom_call.1} parent=63 // pred_region
          %497 = dma.done %s489, 128
        $region76: #{tpu_custom_call.1} parent=63 // pred_fallthru
          _
        %s498 = sand.u32 %s34, 1
        %s499 = scalar_lea.sflag [#allocation10], %s498
        %s500 = sand.u32 %s115, 1
        %s501 = smul.addr %s500, 8
        %s502 = scalar_lea.vmem [#allocation9], %s501
        // Predicated region
        $region77: #{tpu_custom_call.1} parent=63 // pred_check
          %p503 = pneg %p128
        $region78: #{tpu_custom_call.1} parent=63 // pred_check_branch
          %505 = sbr.rel (%p503) target = $region80
        $region79: #{tpu_custom_call.1} parent=63 // pred_region
          %507 = dma.done %s499, 128
        $region80: #{tpu_custom_call.1} parent=63 // pred_fallthru
          _
        %s508 = sand.u32 %s34, 1
        %s509 = scalar_lea.sflag [#allocation10], %s508
        %s510 = sand.u32 %s141, 1
        %s511 = smul.addr %s510, 8
        %s512 = scalar_lea.vmem [#allocation11], %s511
        // Predicated region
        $region81: #{tpu_custom_call.1} parent=63 // pred_check
          %p513 = pneg %p154
        $region82: #{tpu_custom_call.1} parent=63 // pred_check_branch
          %515 = sbr.rel (%p513) target = $region84
        $region83: #{tpu_custom_call.1} parent=63 // pred_region
          %517 = dma.done %s509, 128
        $region84: #{tpu_custom_call.1} parent=63 // pred_fallthru
          _
        // Predicated region
        $region85: #{tpu_custom_call.1} parent=63 // pred_check
          %p518 = pneg %p175
        $region86: #{tpu_custom_call.1} parent=63 // pred_check_branch
          %520 = sbr.rel (%p518) target = $region88
        $region87: #{tpu_custom_call.1} parent=63 // pred_region
          %522 = dma.done [#allocation13], 512
        $region88: #{tpu_custom_call.1} parent=63 // pred_fallthru
          _
        // Predicated region
        $region89: #{tpu_custom_call.1} parent=63 // pred_check
          %p523 = pneg %p217
        $region90: #{tpu_custom_call.1} parent=63 // pred_check_branch
          %525 = sbr.rel (%p523) target = $region92
        $region91: #{tpu_custom_call.1} parent=63 // pred_region
          %527 = dma.done [#allocation13], 512
        $region92: #{tpu_custom_call.1} parent=63 // pred_fallthru
          _
        // Predicated region
        $region93: #{tpu_custom_call.1} parent=63 // pred_check
          %p528 = pneg %p259
        $region94: #{tpu_custom_call.1} parent=63 // pred_check_branch
          %530 = sbr.rel (%p528) target = $region96
        $region95: #{tpu_custom_call.1} parent=63 // pred_region
          %532 = dma.done [#allocation16], 512
        $region96: #{tpu_custom_call.1} parent=63 // pred_fallthru
          _
        %p533 = pneg %p50
        %p534 = pneg %p47
        %s535 = sand.u32 %s34, 1
        %s536 = scalar_lea.sflag [#allocation7], %s535
        %s537 = sand.u32 %s63, 1
        %s538 = smul.addr %s537, 4
        %s539 = scalar_lea.vmem [#allocation6], %s538
        %p540 = pneg %p76
        %p541 = pneg %p73
        %s542 = sand.u32 %s34, 1
        %s543 = scalar_lea.sflag [#allocation7], %s542
        %s544 = sand.u32 %s89, 1
        %s545 = smul.addr %s544, 8
        %s546 = scalar_lea.vmem [#allocation8], %s545
        %p547 = pneg %p102
        %p548 = pneg %p99
        %s549 = sand.u32 %s34, 1
        %s550 = scalar_lea.sflag [#allocation10], %s549
        %s551 = sand.u32 %s115, 1
        %s552 = smul.addr %s551, 8
        %s553 = scalar_lea.vmem [#allocation9], %s552
        %p554 = pneg %p128
        %p555 = pneg %p125
        %s556 = sand.u32 %s34, 1
        %s557 = scalar_lea.sflag [#allocation10], %s556
        %s558 = sand.u32 %s141, 1
        %s559 = smul.addr %s558, 8
        %s560 = scalar_lea.vmem [#allocation11], %s559
        %p561 = pneg %p154
        %p562 = pneg %p151
        %p563 = pneg %p175
        %p564 = pneg %p172
        %p565 = pneg %p196
        %p566 = pneg %p193
        %p567 = pneg %p217
        %p568 = pneg %p214
        %p569 = pneg %p238
        %p570 = pneg %p235
        %p571 = pneg %p259
        %p572 = pneg %p256
        %p573 = pneg %p280
        %p574 = pneg %p277
        %p575 = pneg %p306
        %p576 = pneg %p303
        %s577 = sand.u32 %s293, 1
        %s578 = scalar_lea.sflag [#allocation5], %s577
        %s579 = sand.u32 %s293, 1
        %s580 = smul.addr %s579, 8
        %s581 = scalar_lea.vmem [#allocation17], %s580
        %v583 = vld [vmem:[#allocation12] sm:$0xff]
        %v584 = vld [vmem:[#allocation12 + $0x8] sm:$0xff]
        %v585 = vld [vmem:[#allocation12 + $0x10] sm:$0xff]
        %v586 = vld [vmem:[#allocation12 + $0x18] sm:$0xff]
        %v587 = vpack.c.bf16 %v584, %v583
        %v588 = vpack.c.bf16 %v586, %v585
        %v589 = vld [vmem:[#allocation14] sm:$0xff]
        %v590 = vld [vmem:[#allocation14 + $0x8] sm:$0xff]
        %v591 = vld [vmem:[#allocation14 + $0x10] sm:$0xff]
        %v592 = vld [vmem:[#allocation14 + $0x18] sm:$0xff]
        %v593 = vpack.c.bf16 %v590, %v589
        %v594 = vpack.c.bf16 %v592, %v591
        %v595 = vld [vmem:[%s6] sm:$0x1]
        %v596 = vld [vmem:[%s492] sm:$0xff]
        %v597 = vpack.c.bf16 %v596, %v596
        %v599 = vperm.slane %v595, 0
        %vm601 = vcmask 261120
        %v603 = vsel %vm601, %v597, 0
        %605 = vmatpush.bf16.msra.mxu0 0
        %606 = vmatpush.bf16.msra.mxu0 0
        %607 = vmatpush.bf16.msra.mxu0 0
        %608 = vmatpush.bf16.msra.mxu0 0
        %609 = vmatpush.bf16.msra.mxu0 0
        %610 = vmatpush.bf16.msra.mxu0 0
        %611 = vmatpush.bf16.msra.mxu0 %v588
        %612 = vmatpush.bf16.msra.mxu0 %v587
        %613 = vmatmul.bf16.gmra.mxu0 %v603
        %v614 = vpop.f32.mrf.mxu0
        %v615 = vadd.f32 %v599, %v614
        %v616 = vpop.f32.mrf.mxu0
        %617 = vdwg.mxu0
        %v618 = vld [vmem:[%s502] sm:$0xff]
        %v619 = vpack.c.bf16 %v618, %v618
        %v621 = vsel %vm601, %v619, 0
        %623 = vmatpush.bf16.msra.mxu0 0
        %624 = vmatpush.bf16.msra.mxu0 0
        %625 = vmatpush.bf16.msra.mxu0 0
        %626 = vmatpush.bf16.msra.mxu0 0
        %627 = vmatpush.bf16.msra.mxu0 0
        %628 = vmatpush.bf16.msra.mxu0 0
        %629 = vmatpush.bf16.msra.mxu0 %v588
        %630 = vmatpush.bf16.msra.mxu0 %v587
        %631 = vmatmul.bf16.gmra.mxu0 %v621
        %v632 = vpop.f32.mrf.mxu0
        %v633 = vadd.f32 %v599, %v632
        %v634 = vpop.f32.mrf.mxu0
        %635 = vdwg.mxu0
        %v636 = vld [vmem:[%s512] sm:$0xff]
        %v637 = vpack.c.bf16 %v636, %v636
        %v638 = vld [vmem:[%s8] sm:$0x1]
        %v640 = vperm.slane %v638, 0
        %v643 = vsel %vm601, %v637, 0
        %645 = vmatpush.bf16.msra.mxu0 0
        %646 = vmatpush.bf16.msra.mxu0 0
        %647 = vmatpush.bf16.msra.mxu0 0
        %648 = vmatpush.bf16.msra.mxu0 0
        %649 = vmatpush.bf16.msra.mxu0 0
        %650 = vmatpush.bf16.msra.mxu0 0
        %651 = vmatpush.bf16.msra.mxu0 %v594
        %652 = vmatpush.bf16.msra.mxu0 %v593
        %653 = vmatmul.bf16.gmra.mxu0 %v643
        %v654 = vpop.f32.mrf.mxu0
        %v655 = vadd.f32 %v640, %v654
        %v656 = vpop.f32.mrf.mxu0
        %657 = vdwg.mxu0
        %v658 = vlaneseq
        %v659 = vshrl.u32 %v658, 7
        %v660 = vlaneseq
        %v661 = vand.u32 %v660, 127
        %vm662 = vcmp.gt.s32.totalorder %v661, %v659
        %v663 = vld [vmem:[%s482] sm:$0xf]
        %v664 = vunpack.c.l.bf16 %v663
        %v665 = vpack.c.bf16 %v615, %v615
        %v666 = vpack.c.bf16 %v633, %v633
        %v667 = vpack.c.bf16 %v655, %v655
        %vm668 = vcmask 64512
        %v670 = vsel %vm668, %v665, 0
        %v673 = vsel %vm668, %v666, 0
        %675 = vmatpush.bf16.xpose.msra.mxu0 0
        %676 = vmatpush.bf16.xpose.msra.mxu0 0
        %677 = vmatpush.bf16.xpose.msra.mxu0 0
        %678 = vmatpush.bf16.xpose.msra.mxu0 0
        %679 = vmatpush.bf16.xpose.msra.mxu0 0
        %680 = vmatpush.bf16.xpose.msra.mxu0 0
        %681 = vmatpush.bf16.xpose.msra.mxu0 0
        %682 = vmatpush.bf16.xpose.msra.mxu0 %v673
        %683 = vmatmul.bf16.gmra.mxu0 %v670
        %v684 = vpop.f32.mrf.mxu0
        %v685 = vadd.f32 0.0, %v684
        %v686 = vpop.f32.mrf.mxu0
        %687 = vdwg.mxu0
        %v688 = vmul.f32 %v685, %v664
        %v689 = vld [vmem:[#allocation3] sm:$0xf]
        %v690 = vunpack.c.l.bf16 %v689
        %v691 = vmul.f32 %v688, %v690
        %v692 = vsel %vm662, -1e+32, %v691
        %v693 = vsel %vm668, %v692, -inf
        %694 = vmax.xlane.f32.xlu0 %v693
        %v695 = vpop.xlane.xlu0 %694
        %v696 = vsub.f32 %v692, %v695
        %v697 = vmul.f32 %v696, 1.442695
        %v698 = vpow.pop %v697
        %v699 = vsel %vm668, %v698, 0.0
        %700 = vadd.xlane.f32.xlu0 %v699
        %v701 = vpop.xlane.xlu0 %700
        %v702 = vrcp.pop %v701
        %v703 = vmul.f32 %v698, %v702
        %v704 = vpack.c.bf16 %v703, %v703
        %v706 = vsel %vm668, %v704, 0
        %vm708 = vcmask 1043456
        %v710 = vsel %vm708, %v667, 0
        %712 = vmatpush.bf16.msra.mxu0 0
        %713 = vmatpush.bf16.msra.mxu0 0
        %714 = vmatpush.bf16.msra.mxu0 0
        %715 = vmatpush.bf16.msra.mxu0 0
        %716 = vmatpush.bf16.msra.mxu0 0
        %717 = vmatpush.bf16.msra.mxu0 0
        %718 = vmatpush.bf16.msra.mxu0 0
        %719 = vmatpush.bf16.msra.mxu0 %v710
        %720 = vmatmul.bf16.gmra.mxu0 %v706
        %v721 = vpop.f32.mrf.mxu0
        %v722 = vadd.f32 0.0, %v721
        %v723 = vpop.f32.mrf.mxu0
        %724 = vdwg.mxu0
        %725 = vst.msk [vmem:[#allocation2] sm:$0xff] %vm668, %v722
        %727 = vrot.lane.b32.xlu0 %v665, 120
        %v728 = vpop.permute.xlu0 %727
        %730 = vrot.lane.b32.xlu0 %v666, 120
        %v731 = vpop.permute.xlu0 %730
        %v733 = vsel %vm668, %v728, 0
        %v736 = vsel %vm668, %v731, 0
        %738 = vmatpush.bf16.xpose.msra.mxu0 0
        %739 = vmatpush.bf16.xpose.msra.mxu0 0
        %740 = vmatpush.bf16.xpose.msra.mxu0 0
        %741 = vmatpush.bf16.xpose.msra.mxu0 0
        %742 = vmatpush.bf16.xpose.msra.mxu0 0
        %743 = vmatpush.bf16.xpose.msra.mxu0 0
        %744 = vmatpush.bf16.xpose.msra.mxu0 0
        %745 = vmatpush.bf16.xpose.msra.mxu0 %v736
        %746 = vmatmul.bf16.gmra.mxu0 %v733
        %v747 = vpop.f32.mrf.mxu0
        %v748 = vadd.f32 0.0, %v747
        %v749 = vpop.f32.mrf.mxu0
        %750 = vdwg.mxu0
        %v751 = vmul.f32 %v748, %v664
        %s752 = scalar_lea.vmem [#allocation3], 4
        %v753 = vld [vmem:[%s752] sm:$0xf]
        %v754 = vunpack.c.l.bf16 %v753
        %v755 = vmul.f32 %v751, %v754
        %v756 = vsel %vm662, -1e+32, %v755
        %v757 = vsel %vm668, %v756, -inf
        %758 = vmax.xlane.f32.xlu0 %v757
        %v759 = vpop.xlane.xlu0 %758
        %v760 = vsub.f32 %v756, %v759
        %v761 = vmul.f32 %v760, 1.442695
        %v762 = vpow.pop %v761
        %v763 = vsel %vm668, %v762, 0.0
        %764 = vadd.xlane.f32.xlu0 %v763
        %v765 = vpop.xlane.xlu0 %764
        %v766 = vrcp.pop %v765
        %v767 = vmul.f32 %v762, %v766
        %v768 = vpack.c.bf16 %v767, %v767
        %770 = vrot.lane.b32.xlu0 %v667, 120
        %v771 = vpop.permute.xlu0 %770
        %v773 = vsel %vm668, %v768, 0
        %v776 = vsel %vm708, %v771, 0
        %778 = vmatpush.bf16.msra.mxu0 0
        %779 = vmatpush.bf16.msra.mxu0 0
        %780 = vmatpush.bf16.msra.mxu0 0
        %781 = vmatpush.bf16.msra.mxu0 0
        %782 = vmatpush.bf16.msra.mxu0 0
        %783 = vmatpush.bf16.msra.mxu0 0
        %784 = vmatpush.bf16.msra.mxu0 0
        %785 = vmatpush.bf16.msra.mxu0 %v776
        %786 = vmatmul.bf16.gmra.mxu0 %v773
        %v787 = vpop.f32.mrf.mxu0
        %v788 = vadd.f32 0.0, %v787
        %v789 = vpop.f32.mrf.mxu0
        %790 = vdwg.mxu0
        %792 = vrot.lane.b32.xlu0 %v788, 8
        %v793 = vpop.permute.xlu0 %792
        %vm795 = vcmask 130112
        %796 = vst.msk [vmem:[#allocation2] sm:$0xff] %vm795, %v793
        %797 = vrot.lane.b32.xlu0 %v665, 112
        %v798 = vpop.permute.xlu0 %797
        %799 = vrot.lane.b32.xlu0 %v666, 112
        %v800 = vpop.permute.xlu0 %799
        %v802 = vsel %vm668, %v798, 0
        %v805 = vsel %vm668, %v800, 0
        %807 = vmatpush.bf16.xpose.msra.mxu0 0
        %808 = vmatpush.bf16.xpose.msra.mxu0 0
        %809 = vmatpush.bf16.xpose.msra.mxu0 0
        %810 = vmatpush.bf16.xpose.msra.mxu0 0
        %811 = vmatpush.bf16.xpose.msra.mxu0 0
        %812 = vmatpush.bf16.xpose.msra.mxu0 0
        %813 = vmatpush.bf16.xpose.msra.mxu0 0
        %814 = vmatpush.bf16.xpose.msra.mxu0 %v805
        %815 = vmatmul.bf16.gmra.mxu0 %v802
        %v816 = vpop.f32.mrf.mxu0
        %v817 = vadd.f32 0.0, %v816
        %v818 = vpop.f32.mrf.mxu0
        %819 = vdwg.mxu0
        %v820 = vmul.f32 %v817, %v664
        %s821 = scalar_lea.vmem [#allocation3], 8
        %v822 = vld [vmem:[%s821] sm:$0xf]
        %v823 = vunpack.c.l.bf16 %v822
        %v824 = vmul.f32 %v820, %v823
        %v825 = vsel %vm662, -1e+32, %v824
        %v826 = vsel %vm668, %v825, -inf
        %827 = vmax.xlane.f32.xlu0 %v826
        %v828 = vpop.xlane.xlu0 %827
        %v829 = vsub.f32 %v825, %v828
        %v830 = vmul.f32 %v829, 1.442695
        %v831 = vpow.pop %v830
        %v832 = vsel %vm668, %v831, 0.0
        %833 = vadd.xlane.f32.xlu0 %v832
        %v834 = vpop.xlane.xlu0 %833
        %v835 = vrcp.pop %v834
        %v836 = vmul.f32 %v831, %v835
        %v837 = vpack.c.bf16 %v836, %v836
        %838 = vrot.lane.b32.xlu0 %v667, 112
        %v839 = vpop.permute.xlu0 %838
        %v841 = vsel %vm668, %v837, 0
        %v844 = vsel %vm708, %v839, 0
        %846 = vmatpush.bf16.msra.mxu0 0
        %847 = vmatpush.bf16.msra.mxu0 0
        %848 = vmatpush.bf16.msra.mxu0 0
        %849 = vmatpush.bf16.msra.mxu0 0
        %850 = vmatpush.bf16.msra.mxu0 0
        %851 = vmatpush.bf16.msra.mxu0 0
        %852 = vmatpush.bf16.msra.mxu0 0
        %853 = vmatpush.bf16.msra.mxu0 %v844
        %854 = vmatmul.bf16.gmra.mxu0 %v841
        %v855 = vpop.f32.mrf.mxu0
        %v856 = vadd.f32 0.0, %v855
        %v857 = vpop.f32.mrf.mxu0
        %858 = vdwg.mxu0
        %860 = vrot.lane.b32.xlu0 %v856, 16
        %v861 = vpop.permute.xlu0 %860
        %vm863 = vcmask 195712
        %864 = vst.msk [vmem:[#allocation2] sm:$0xff] %vm863, %v861
        %865 = vrot.lane.b32.xlu0 %v665, 104
        %v866 = vpop.permute.xlu0 %865
        %867 = vrot.lane.b32.xlu0 %v666, 104
        %v868 = vpop.permute.xlu0 %867
        %v870 = vsel %vm668, %v866, 0
        %v873 = vsel %vm668, %v868, 0
        %875 = vmatpush.bf16.xpose.msra.mxu0 0
        %876 = vmatpush.bf16.xpose.msra.mxu0 0
        %877 = vmatpush.bf16.xpose.msra.mxu0 0
        %878 = vmatpush.bf16.xpose.msra.mxu0 0
        %879 = vmatpush.bf16.xpose.msra.mxu0 0
        %880 = vmatpush.bf16.xpose.msra.mxu0 0
        %881 = vmatpush.bf16.xpose.msra.mxu0 0
        %882 = vmatpush.bf16.xpose.msra.mxu0 %v873
        %883 = vmatmul.bf16.gmra.mxu0 %v870
        %v884 = vpop.f32.mrf.mxu0
        %v885 = vadd.f32 0.0, %v884
        %v886 = vpop.f32.mrf.mxu0
        %887 = vdwg.mxu0
        %v888 = vmul.f32 %v885, %v664
        %s889 = scalar_lea.vmem [#allocation3], 12
        %v890 = vld [vmem:[%s889] sm:$0xf]
        %v891 = vunpack.c.l.bf16 %v890
        %v892 = vmul.f32 %v888, %v891
        %v893 = vsel %vm662, -1e+32, %v892
        %v894 = vsel %vm668, %v893, -inf
        %895 = vmax.xlane.f32.xlu0 %v894
        %v896 = vpop.xlane.xlu0 %895
        %v897 = vsub.f32 %v893, %v896
        %v898 = vmul.f32 %v897, 1.442695
        %v899 = vpow.pop %v898
        %v900 = vsel %vm668, %v899, 0.0
        %901 = vadd.xlane.f32.xlu0 %v900
        %v902 = vpop.xlane.xlu0 %901
        %v903 = vrcp.pop %v902
        %v904 = vmul.f32 %v899, %v903
        %v905 = vpack.c.bf16 %v904, %v904
        %906 = vrot.lane.b32.xlu0 %v667, 104
        %v907 = vpop.permute.xlu0 %906
        %v909 = vsel %vm668, %v905, 0
        %v912 = vsel %vm708, %v907, 0
        %914 = vmatpush.bf16.msra.mxu0 0
        %915 = vmatpush.bf16.msra.mxu0 0
        %916 = vmatpush.bf16.msra.mxu0 0
        %917 = vmatpush.bf16.msra.mxu0 0
        %918 = vmatpush.bf16.msra.mxu0 0
        %919 = vmatpush.bf16.msra.mxu0 0
        %920 = vmatpush.bf16.msra.mxu0 0
        %921 = vmatpush.bf16.msra.mxu0 %v912
        %922 = vmatmul.bf16.gmra.mxu0 %v909
        %v923 = vpop.f32.mrf.mxu0
        %v924 = vadd.f32 0.0, %v923
        %v925 = vpop.f32.mrf.mxu0
        %926 = vdwg.mxu0
        %928 = vrot.lane.b32.xlu0 %v924, 24
        %v929 = vpop.permute.xlu0 %928
        %vm931 = vcmask 261312
        %932 = vst.msk [vmem:[#allocation2] sm:$0xff] %vm931, %v929
        %vm933 = vcmask 253952
        %934 = vst.msk [vmem:[#allocation2] sm:$0x1] %vm933, 0.0
        %v935 = vld [vmem:[#allocation2] sm:$0xff]
        %v936 = vpack.c.bf16 %v935, %v935
        %v937 = vld [vmem:[#allocation15] sm:$0xff]
        %v938 = vld [vmem:[#allocation15 + $0x8] sm:$0xff]
        %v939 = vld [vmem:[#allocation15 + $0x10] sm:$0xff]
        %v940 = vld [vmem:[#allocation15 + $0x18] sm:$0xff]
        %v941 = vpack.c.bf16 %v938, %v937
        %v942 = vpack.c.bf16 %v940, %v939
        %v943 = vld [vmem:[%s10] sm:$0x1]
        %v945 = vperm.slane %v943, 0
        %v948 = vsel %vm601, %v936, 0
        %950 = vmatpush.bf16.msra.mxu0 0
        %951 = vmatpush.bf16.msra.mxu0 0
        %952 = vmatpush.bf16.msra.mxu0 0
        %953 = vmatpush.bf16.msra.mxu0 0
        %954 = vmatpush.bf16.msra.mxu0 0
        %955 = vmatpush.bf16.msra.mxu0 0
        %956 = vmatpush.bf16.msra.mxu0 %v942
        %957 = vmatpush.bf16.msra.mxu0 %v941
        %958 = vmatmul.bf16.gmra.mxu0 %v948
        %v959 = vpop.f32.mrf.mxu0
        %v960 = vadd.f32 %v945, %v959
        %v961 = vpop.f32.mrf.mxu0
        %962 = vdwg.mxu0
        %963 = vst.msk [vmem:[%s581] sm:$0xff] %vm601, %v960
        %s964 = sand.u32 %s293, 1
        %s965 = scalar_lea.sflag [#allocation5], %s964
        %s966 = sand.u32 %s293, 1
        %s967 = smul.addr %s966, 8
        %s968 = scalar_lea.vmem [#allocation17], %s967
        // Predicated region
        $region97: #{tpu_custom_call.1} parent=63 // pred_check
          %p969 = pneg %p303
        $region98: #{tpu_custom_call.1} parent=63 // pred_check_branch
          %971 = sbr.rel (%p969) target = $region100
        $region99: #{tpu_custom_call.1} parent=63 // pred_region
          %973 = vsyncadd %s965, 0
          %s974 = smul.addr %s34, 8
          %s975 = scalar_lea.hbm %s11, %s974
          %s977 = sshll.u32 %s968, 4
          %s978 = int_to_ptr.vmem [resolvable:$true] %s977
          %s979 = sshll.u32 %s975, 4
          %s980 = int_to_ptr.hbm [resolvable:$true] %s979
          %982 = dma.vmem_to_hbm [thread:$0]  %s978, 128, %s980, %s965
        $region100: #{tpu_custom_call.1} parent=63 // pred_fallthru
          _
      $region64: #{tpu_custom_call.1} parent=5 // pred_fallthru
        _
      %p983 = scmp.le.s32.totalorder 2, %s29
      // Predicated region
      $region101: #{tpu_custom_call.1} parent=5 // pred_check
        %p984 = pneg %p983
      $region102: #{tpu_custom_call.1} parent=5 // pred_check_branch
        %986 = sbr.rel (%p984) target = $region104
      $region103: #{tpu_custom_call.1} parent=5 // pred_region
        %s987 = ssub.s32 %s29, 2
        // Predicated region
        $region105: #{tpu_custom_call.1} parent=103 // pred_check
          %p988 = pneg %p309
        $region106: #{tpu_custom_call.1} parent=103 // pred_check_branch
          %990 = sbr.rel (%p988) target = $region108
        $region107: #{tpu_custom_call.1} parent=103 // pred_region
          %s991 = sand.u32 %s294, 1
          %s992 = scalar_lea.sflag [#allocation5], %s991
          %s993 = sand.u32 %s294, 1
          %s994 = smul.addr %s993, 8
          %s995 = scalar_lea.vmem [#allocation17], %s994
          %997 = dma.done %s992, 128
        $region108: #{tpu_custom_call.1} parent=103 // pred_fallthru
          _
      $region104: #{tpu_custom_call.1} parent=5 // pred_fallthru
        _
    $region6: #{tpu_custom_call.1} parent=1 // loop_footer
      %s33 = sadd.s32 1, %s29
    $region7: #{tpu_custom_call.1} parent=1 // loop_footer_branch
      %28 = sbr.rel target = $region3
    $region8: #{tpu_custom_call.1} parent=1 // loop_exit
      _
    %998 = vsyncpa [#allocation4], 1
    %s999 = scalar_lea.sflag [#allocation4], 1
    %1000 = vsyncpa %s999, 1
    %1001 = vsyncpa [#allocation7], 1
    %s1002 = scalar_lea.sflag [#allocation7], 1
    %1003 = vsyncpa %s1002, 1
    %1004 = vsyncpa [#allocation10], 1
    %s1005 = scalar_lea.sflag [#allocation10], 1
    %1006 = vsyncpa %s1005, 1
    %1007 = vsyncpa [#allocation13], 1
    %1008 = vsyncpa [#allocation16], 1
    %1009 = vsyncpa [#allocation5], 1
    %s1010 = scalar_lea.sflag [#allocation5], 1
    %1011 = vsyncpa %s1010, 1

</llo_original>
